<compile_context>
chip_gen: v6e
topology: v6e:2x2x1
jax: 0.10.0
libtpu: 0.0.40
codegen_flags: <defaults>
</compile_context>

<pallas_src>
import jax
import jax.numpy as jnp
from jax.experimental import pallas as pl
from jax.experimental.pallas import tpu as pltpu

# ----- model / problem sizes (small, consistent with the module) -----
SRC_VOCAB = 20
EMB = 16                     # src_vocab.vectors.size()[1]
TRG_VOCAB = 13               # len(trg_vocab) == V
HID = 32                     # rnn_hid_dim
COMP = 8                     # compensating_dim
NUM_LAYERS = 2               # num_rnn_layers
L = 8                        # sequence length
B = 2                        # batch
D_IN = EMB + COMP            # GRU layer-0 input dim
OUT_DIM = TRG_VOCAB + 3      # output head dim
G3 = 3 * HID                 # fused gate width (r | z | n)
LB = L * B

# ----- packed f32 parameter slab layout (row offsets 8-aligned for clean vlds) -----
PF_W = 4 * HID               # 128 lanes (widest row: fused layer-1 bias)
R_WEMB0 = 0                  # (SRC_VOCAB, 3H) frozen embedding folded into W_ih0
R_WC0 = 24                   # (COMP, 3H)      compensation slice of W_ih0
R_B0 = 32                    # (1, 3H)  b_ih0 + b_hh0 (r,z) ; b_ih0 (n)
R_BH0N = 33                  # (1, H)   b_hh0 (n)  (stays inside the r0*(.) factor)
R_B1ALL = 34                 # (1, 4H)  [b_ih1+b_hh1 (r,z) | b_ih1 (n) | b_hh1 (n)]
R_WOUT = 40                  # (H, OUT_DIM)
R_BOUT = 72                  # (1, OUT_DIM)
R_WCOMP = 80                 # (TRG_VOCAB, COMP)
R_BCOMP = 93                 # (1, COMP)
PF_ROWS = 96

# bf16 fused recurrence weight (2H, 7H):
#   cols 0:3H    -> gh0   = h0 @ u0
#   cols 3H:5H   -> rz1   = s0 @ w1[rz] + h1 @ u1[rz]
#   cols 5H:6H   -> n1_in = s0 @ w1[n]
#   cols 6H:7H   -> n1_h  = h1 @ u1[n]
WREC_SHAPE = (2 * HID, 7 * HID)          # (64, 224)

OUT_ROWS = LB + NUM_LAYERS * B           # merged output slab rows (logits|comp, then hT)


def rql_kernel(src_ref, comp_ref, hinit_ref, pf_ref, wrec_ref, out_ref, hseq):
    H = HID

    # ---- frozen-embedding gather as a one-hot matmul (emb folded into W_ih0) ----
    ids = src_ref[...]                                               # (LB, 1) i32
    lane = jax.lax.broadcasted_iota(jnp.int32, (LB, SRC_VOCAB), 1)
    onehot = (lane == ids).astype(jnp.float32)                       # (LB, Vsrc)

    # ---- layer-0 input->hidden pre-activations for ALL timesteps (batched, f32) ----
    gi0_all = (jnp.dot(onehot, pf_ref[R_WEMB0:R_WEMB0 + SRC_VOCAB, 0:G3],
                       preferred_element_type=jnp.float32)
               + jnp.dot(comp_ref[...], pf_ref[R_WC0:R_WC0 + COMP, 0:G3],
                         preferred_element_type=jnp.float32)
               + pf_ref[R_B0:R_B0 + 1, 0:G3])                        # (LB, 3H)

    # ---- hoisted bias broadcasts (JAX does not CSE broadcast_in_dim in the loop) ----
    bh0n = jnp.broadcast_to(pf_ref[R_BH0N:R_BH0N + 1, 0:H], (B, H))
    b1a = jnp.broadcast_to(pf_ref[R_B1ALL:R_B1ALL + 1, 0:4 * H], (B, 4 * H))

    wrec = wrec_ref[...]                                             # (2H, 7H) bf16

    def rec_dot(h0, h1):
        # one fused MXU op per wavefront step: [gh0 | rz1_sum | n1_in | n1_h]
        hcat = jnp.concatenate([h0, h1], axis=1).astype(jnp.bfloat16)     # (B, 2H)
        return jnp.dot(hcat, wrec, preferred_element_type=jnp.float32)    # (B, 7H) f32

    def cell0(gi, y, h):
        # gi holds x@W_ih0 + b_ih0 + b_hh0(r,z); bh0n stays inside the r*(.) factor.
        rz = jax.nn.sigmoid(gi[:, 0:2 * H] + y[:, 0:2 * H])
        r, z = rz[:, 0:H], rz[:, H:2 * H]
        n = jnp.tanh(gi[:, 2 * H:3 * H] + r * (y[:, 2 * H:3 * H] + bh0n))
        return (1.0 - z) * n + z * h

    def cell1(y, h):
        y1 = y[:, 3 * H:7 * H] + b1a                # [rz_sum | n_in | n_h] + biases
        rz = jax.nn.sigmoid(y1[:, 0:2 * H])
        r, z = rz[:, 0:H], rz[:, H:2 * H]
        n = jnp.tanh(y1[:, 2 * H:3 * H] + r * y1[:, 3 * H:4 * H])
        return (1.0 - z) * n + z * h

    h0 = hinit_ref[0:B, :]                                           # (B, H)
    h1 = hinit_ref[B:2 * B, :]

    # ---- prologue: layer-0 step 0 ----
    y = rec_dot(h0, h1)
    h0 = cell0(gi0_all[0:B, :], y, h0)

    # ---- wavefront: layer-1 step t-1 || layer-0 step t (fully unrolled) ----
    for t in range(1, L):
        y = rec_dot(h0, h1)                          # reads h0^(t-1), h1^(t-2)
        h1 = cell1(y, h1)                            # layer-1 step t-1
        hseq[(t - 1) * B:t * B, :] = h1
        h0 = cell0(gi0_all[t * B:(t + 1) * B, :], y, h0)    # layer-0 step t

    # ---- epilogue: layer-1 step L-1 ----
    y = rec_dot(h0, h1)
    h1 = cell1(y, h1)
    hseq[(L - 1) * B:L * B, :] = h1

    # final GRU states -> tail rows of the merged output slab
    out_ref[LB:LB + B, 0:H] = h0
    out_ref[LB + B:LB + 2 * B, 0:H] = h1

    # ---- batched output head + softmax + compensating head ----
    hs = hseq[...]                                                   # (LB, H)
    logits_full = (jnp.dot(hs, pf_ref[R_WOUT:R_WOUT + H, 0:OUT_DIM],
                           preferred_element_type=jnp.float32)
                   + pf_ref[R_BOUT:R_BOUT + 1, 0:OUT_DIM])           # (LB, V+3)
    logits = logits_full[:, 0:TRG_VOCAB]
    m = jnp.max(logits, axis=-1, keepdims=True)
    e = jnp.exp(logits - m)
    p = e * pl.reciprocal(jnp.sum(e, axis=-1, keepdims=True), approx=True)
    comp = (jnp.dot(p, pf_ref[R_WCOMP:R_WCOMP + TRG_VOCAB, 0:COMP],
                    preferred_element_type=jnp.float32)
            + pf_ref[R_BCOMP:R_BCOMP + 1, 0:COMP])
    out_ref[0:LB, 0:OUT_DIM + COMP] = jnp.concatenate(
        [logits_full, jnp.maximum(comp, 0.0)], axis=1)               # single store


@jax.jit
def rql_compensating2_forward(src, rnn_state, compensation, fused):
    src_flat = src.reshape(LB, 1).astype(jnp.int32)
    comp_flat = compensation.reshape(LB, COMP).astype(jnp.float32)
    h_flat = rnn_state.reshape(NUM_LAYERS * B, HID).astype(jnp.float32)

    vmem = pl.BlockSpec(memory_space=pltpu.MemorySpace.VMEM)
    slab = pl.pallas_call(
        rql_kernel,
        out_shape=jax.ShapeDtypeStruct((OUT_ROWS, HID), jnp.float32),
        in_specs=[vmem] * 5,
        out_specs=vmem,
        scratch_shapes=[pltpu.VMEM((LB, HID), jnp.float32)],         # layer-1 h sequence
    )(src_flat, comp_flat, h_flat, fused["pf"], fused["wrec"])

    outputs = slab[:LB, :OUT_DIM].reshape(L, B, OUT_DIM)
    comp_out = slab[:LB, OUT_DIM:OUT_DIM + COMP].reshape(L, B, COMP)
    h_t = slab[LB:, :].reshape(NUM_LAYERS, B, HID)
    return outputs, h_t, comp_out


def prepare_params(p):
    """Fuse/fold PyTorch-style GRU params into two packed kernel slabs (run once)."""
    H = HID
    cat = lambda w: jnp.concatenate([w[0], w[1], w[2]], axis=1)      # (in, 3H), r|z|n
    w_ih0, u0 = cat(p["w_ih0"]), cat(p["w_hh0"])
    w1, u1 = cat(p["w_ih1"]), cat(p["w_hh1"])

    b0 = jnp.concatenate([p["b_ih0"][0] + p["b_hh0"][0],
                          p["b_ih0"][1] + p["b_hh0"][1],
                          p["b_ih0"][2]], axis=1)                    # (1, 3H)
    b1_all = jnp.concatenate([p["b_ih1"][0] + p["b_hh1"][0],
                              p["b_ih1"][1] + p["b_hh1"][1],
                              p["b_ih1"][2], p["b_hh1"][2]], axis=1)  # (1, 4H)

    # frozen embedding folded into layer-0 ih weights (gather == one-hot matmul)
    w_emb0 = jnp.dot(p["emb_table"], w_ih0[:EMB, :])                 # (SRC_VOCAB, 3H)
    w_c0 = w_ih0[EMB:, :]                                            # (COMP, 3H)

    # --- packed f32 parameter slab (one DMA) ---
    pf = jnp.zeros((PF_ROWS, PF_W), jnp.float32)
    pf = pf.at[R_WEMB0:R_WEMB0 + SRC_VOCAB, 0:G3].set(w_emb0)
    pf = pf.at[R_WC0:R_WC0 + COMP, 0:G3].set(w_c0)
    pf = pf.at[R_B0, 0:G3].set(b0[0])
    pf = pf.at[R_BH0N, 0:H].set(p["b_hh0"][2][0])
    pf = pf.at[R_B1ALL, 0:4 * H].set(b1_all[0])
    pf = pf.at[R_WOUT:R_WOUT + H, 0:OUT_DIM].set(p["w_out"])
    pf = pf.at[R_BOUT, 0:OUT_DIM].set(p["b_out"][0])
    pf = pf.at[R_WCOMP:R_WCOMP + TRG_VOCAB, 0:COMP].set(p["w_comp"])
    pf = pf.at[R_BCOMP, 0:COMP].set(p["b_comp"][0])

    # --- packed bf16 block recurrence weight: one (B,2H)@(2H,7H) dot per step ---
    wrec = jnp.zeros(WREC_SHAPE, jnp.float32)
    wrec = wrec.at[0:H, 0:G3].set(u0)                                # gh0 (h0 rows)
    wrec = wrec.at[0:H, G3:G3 + 2 * H].set(w1[:, 0:2 * H])           # rz1, input part
    wrec = wrec.at[H:2 * H, G3:G3 + 2 * H].set(u1[:, 0:2 * H])       # rz1, hidden part
    wrec = wrec.at[0:H, G3 + 2 * H:G3 + 3 * H].set(w1[:, 2 * H:])    # n1, input part
    wrec = wrec.at[H:2 * H, G3 + 3 * H:G3 + 4 * H].set(u1[:, 2 * H:])  # n1, hidden part
    return {"pf": pf, "wrec": wrec.astype(jnp.bfloat16)}


def init_params(key):
    ks = jax.random.split(key, 16)
    kb = 1.0 / jnp.sqrt(jnp.float32(HID))          # PyTorch GRU init bound
    u = lambda k, shape, bound: jax.random.uniform(
        k, shape, jnp.float32, minval=-bound, maxval=bound)
    return {
        # frozen pretrained embedding vectors (synthetic)
        "emb_table": jax.random.normal(ks[0], (SRC_VOCAB, EMB), jnp.float32),
        # GRU layer 0 (input dim = EMB + COMP), gate order (r, z, n)
        "w_ih0": u(ks[1], (3, D_IN, HID), kb),
        "w_hh0": u(ks[2], (3, HID, HID), kb),
        "b_ih0": u(ks[3], (3, 1, HID), kb),
        "b_hh0": u(ks[4], (3, 1, HID), kb),
        # GRU layer 1 (input dim = HID)
        "w_ih1": u(ks[5], (3, HID, HID), kb),
        "w_hh1": u(ks[6], (3, HID, HID), kb),
        "b_ih1": u(ks[7], (3, 1, HID), kb),
        "b_hh1": u(ks[8], (3, 1, HID), kb),
        # output head: Linear(HID -> V+3)
        "w_out": u(ks[9], (HID, OUT_DIM), 1.0 / jnp.sqrt(jnp.float32(HID))),
        "b_out": u(ks[10], (1, OUT_DIM), 1.0 / jnp.sqrt(jnp.float32(HID))),
        # compensating head: Linear(V -> COMP)
        "w_comp": u(ks[11], (TRG_VOCAB, COMP),
                    1.0 / jnp.sqrt(jnp.float32(TRG_VOCAB))),
        "b_comp": u(ks[12], (1, COMP), 1.0 / jnp.sqrt(jnp.float32(TRG_VOCAB))),
    }


def reference_forward(src, rnn_state, compensation, p):
    """Plain-JAX (all-f32) reference with un-fused PyTorch-style params."""
    emb = jnp.take(p["emb_table"], src, axis=0)                      # (L, B, EMB)
    x = jnp.concatenate([emb, compensation], axis=2)                 # (L, B, D_IN)

    def gru_layer(xs, h, w_ih, w_hh, b_ih, b_hh):
        outs = []
        for t in range(L):
            xt = xs[t]
            r = jax.nn.sigmoid(xt @ w_ih[0] + b_ih[0] + h @ w_hh[0] + b_hh[0])
            z = jax.nn.sigmoid(xt @ w_ih[1] + b_ih[1] + h @ w_hh[1] + b_hh[1])
            n = jnp.tanh(xt @ w_ih[2] + b_ih[2] + r * (h @ w_hh[2] + b_hh[2]))
            h = (1.0 - z) * n + z * h
            outs.append(h)
        return jnp.stack(outs, axis=0), h

    y0, h0T = gru_layer(x, rnn_state[0], p["w_ih0"], p["w_hh0"],
                        p["b_ih0"], p["b_hh0"])
    y1, h1T = gru_layer(y0, rnn_state[1], p["w_ih1"], p["w_hh1"],
                        p["b_ih1"], p["b_hh1"])
    outputs = y1 @ p["w_out"] + p["b_out"]
    probs = jax.nn.softmax(outputs[:, :, :TRG_VOCAB], axis=2)
    comp = jnp.maximum(probs @ p["w_comp"] + p["b_comp"], 0.0)
    return outputs, jnp.stack([h0T, h1T], axis=0), comp


if __name__ == "__main__":
    key = jax.random.PRNGKey(0)
    k_par, k_src, k_h0, k_comp = jax.random.split(key, 4)

    params = init_params(k_par)
    fused = prepare_params(params)            # one-time weight fusion/fold/packing

    src = jax.random.randint(k_src, (L, B), 0, SRC_VOCAB, dtype=jnp.int32)
    rnn_state = jax.random.normal(k_h0, (NUM_LAYERS, B, HID), jnp.float32)
    compensation = jax.random.normal(k_comp, (L, B, COMP), jnp.float32)

    outputs, new_state, new_comp = rql_compensating2_forward(
        src, rnn_state, compensation, fused)
    jax.block_until_ready((outputs, new_state, new_comp))

    # shape / sanity checks
    assert outputs.shape == (L, B, OUT_DIM)
    assert new_state.shape == (NUM_LAYERS, B, HID)
    assert new_comp.shape == (L, B, COMP)
    assert bool(jnp.all(jnp.isfinite(outputs)))
    assert bool(jnp.all(new_comp >= 0.0))        # ReLU output

    # numerical check against an all-f32 plain-JAX reference of the PyTorch module.
    # Tolerance is slightly wider than before because the recurrence matmul
    # operands are bf16 (f32 accumulation) per the performance review.
    TOL = 2.5e-2
    ref_out, ref_state, ref_comp = reference_forward(
        src, rnn_state, compensation, params)
    assert float(jnp.max(jnp.abs(outputs - ref_out))) < TOL
    assert float(jnp.max(jnp.abs(new_state - ref_state))) < TOL
    assert float(jnp.max(jnp.abs(new_comp - ref_comp))) < TOL

    print("KERNEL_OK")
</pallas_src>

<mosaic_0001>
module attributes {stable_mosaic.version = 11 : i64} {
  func.func @rql_kernel(%arg0: memref<16x1xi32, #tpu.memory_space<vmem>>, %arg1: memref<16x8xf32, #tpu.memory_space<vmem>>, %arg2: memref<4x32xf32, #tpu.memory_space<vmem>>, %arg3: memref<96x128xf32, #tpu.memory_space<vmem>>, %arg4: memref<64x224xbf16, #tpu.memory_space<vmem>>, %arg5: memref<20x32xf32, #tpu.memory_space<vmem>>, %arg6: memref<16x32xf32, #tpu.memory_space<vmem>>) attributes {dimension_semantics = [], scalar_prefetch = 0 : i64, scratch_operands = 1 : i64, tpu.core_type = #tpu.core_type<tc>} {
    %c0 = arith.constant 0 : index
    %c0_0 = arith.constant 0 : index
    %0 = vector.load %arg0[%c0, %c0_0] : memref<16x1xi32, #tpu.memory_space<vmem>>, vector<16x1xi32>
    %1 = tpu.iota {dimensions = array<i32: 1>} : vector<16x20xi32>
    %2 = vector.broadcast %0 : vector<16x1xi32> to vector<16x20xi32>
    %3 = arith.cmpi eq, %1, %2 : vector<16x20xi32>
    %4 = arith.extui %3 : vector<16x20xi1> to vector<16x20xi32>
    %5 = arith.sitofp %4 : vector<16x20xi32> to vector<16x20xf32>
    %c0_1 = arith.constant 0 : index
    %c0_2 = arith.constant 0 : index
    %6 = vector.load %arg3[%c0_1, %c0_2] : memref<96x128xf32, #tpu.memory_space<vmem>>, vector<20x96xf32>
    %cst = arith.constant dense<0.000000e+00> : vector<16x96xf32>
    %7 = tpu.matmul %5, %6, %cst {dimension_numbers = #tpu.dot_dimension_numbers<[1], [0], [0], [1], [0, 0, 1, 1], [], []>} : vector<16x20xf32>, vector<20x96xf32>, vector<16x96xf32> -> vector<16x96xf32>
    %c0_3 = arith.constant 0 : index
    %c0_4 = arith.constant 0 : index
    %8 = vector.load %arg1[%c0_3, %c0_4] : memref<16x8xf32, #tpu.memory_space<vmem>>, vector<16x8xf32>
    %c24 = arith.constant 24 : index
    %c0_5 = arith.constant 0 : index
    %9 = vector.load %arg3[%c24, %c0_5] : memref<96x128xf32, #tpu.memory_space<vmem>>, vector<8x96xf32>
    %cst_6 = arith.constant dense<0.000000e+00> : vector<16x96xf32>
    %10 = tpu.matmul %8, %9, %cst_6 {dimension_numbers = #tpu.dot_dimension_numbers<[1], [0], [0], [1], [0, 0, 1, 1], [], []>} : vector<16x8xf32>, vector<8x96xf32>, vector<16x96xf32> -> vector<16x96xf32>
    %11 = arith.addf %7, %10 : vector<16x96xf32>
    %c32 = arith.constant 32 : index
    %c0_7 = arith.constant 0 : index
    %12 = vector.load %arg3[%c32, %c0_7] : memref<96x128xf32, #tpu.memory_space<vmem>>, vector<1x96xf32>
    %13 = vector.broadcast %12 : vector<1x96xf32> to vector<16x96xf32>
    %14 = arith.addf %11, %13 : vector<16x96xf32>
    %c33 = arith.constant 33 : index
    %c0_8 = arith.constant 0 : index
    %15 = vector.load %arg3[%c33, %c0_8] : memref<96x128xf32, #tpu.memory_space<vmem>>, vector<1x32xf32>
    %16 = vector.shape_cast %15 : vector<1x32xf32> to vector<1x32xf32>
    %17 = vector.broadcast %16 : vector<1x32xf32> to vector<2x32xf32>
    %c34 = arith.constant 34 : index
    %c0_9 = arith.constant 0 : index
    %18 = vector.load %arg3[%c34, %c0_9] : memref<96x128xf32, #tpu.memory_space<vmem>>, vector<1x128xf32>
    %19 = vector.shape_cast %18 : vector<1x128xf32> to vector<1x128xf32>
    %20 = vector.broadcast %19 : vector<1x128xf32> to vector<2x128xf32>
    %c0_10 = arith.constant 0 : index
    %c0_11 = arith.constant 0 : index
    %21 = vector.load %arg4[%c0_10, %c0_11] : memref<64x224xbf16, #tpu.memory_space<vmem>>, vector<64x224xbf16>
    %c0_12 = arith.constant 0 : index
    %c0_13 = arith.constant 0 : index
    %22 = vector.load %arg2[%c0_12, %c0_13] : memref<4x32xf32, #tpu.memory_space<vmem>>, vector<2x32xf32>
    %c2 = arith.constant 2 : index
    %c0_14 = arith.constant 0 : index
    %23 = vector.load %arg2[%c2, %c0_14] : memref<4x32xf32, #tpu.memory_space<vmem>>, vector<2x32xf32>
    %24 = tpu.concatenate %22, %23 in 1 : vector<2x32xf32>, vector<2x32xf32> -> vector<2x64xf32>
    %25 = arith.truncf %24 : vector<2x64xf32> to vector<2x64xbf16>
    %cst_15 = arith.constant dense<0.000000e+00> : vector<2x224xf32>
    %26 = tpu.matmul %25, %21, %cst_15 {dimension_numbers = #tpu.dot_dimension_numbers<[1], [0], [0], [1], [0, 0, 1, 1], [], []>} : vector<2x64xbf16>, vector<64x224xbf16>, vector<2x224xf32> -> vector<2x224xf32>
    %27 = vector.extract_strided_slice %14 {offsets = [0, 0], sizes = [2, 96], strides = [1, 1]} : vector<16x96xf32> to vector<2x96xf32>
    %28 = vector.extract_strided_slice %27 {offsets = [0, 0], sizes = [2, 64], strides = [1, 1]} : vector<2x96xf32> to vector<2x64xf32>
    %29 = vector.extract_strided_slice %26 {offsets = [0, 0], sizes = [2, 64], strides = [1, 1]} : vector<2x224xf32> to vector<2x64xf32>
    %30 = arith.addf %28, %29 : vector<2x64xf32>
    %31 = arith.negf %30 : vector<2x64xf32>
    %32 = math.exp %31 : vector<2x64xf32>
    %cst_16 = arith.constant 1.000000e+00 : f32
    %33 = vector.broadcast %cst_16 : f32 to vector<2x64xf32>
    %34 = arith.addf %33, %32 : vector<2x64xf32>
    %35 = arith.divf %33, %34 : vector<2x64xf32>
    %36 = vector.extract_strided_slice %35 {offsets = [0, 0], sizes = [2, 32], strides = [1, 1]} : vector<2x64xf32> to vector<2x32xf32>
    %37 = vector.extract_strided_slice %35 {offsets = [0, 32], sizes = [2, 32], strides = [1, 1]} : vector<2x64xf32> to vector<2x32xf32>
    %38 = vector.extract_strided_slice %27 {offsets = [0, 64], sizes = [2, 32], strides = [1, 1]} : vector<2x96xf32> to vector<2x32xf32>
    %39 = vector.extract_strided_slice %26 {offsets = [0, 64], sizes = [2, 32], strides = [1, 1]} : vector<2x224xf32> to vector<2x32xf32>
    %40 = arith.addf %39, %17 : vector<2x32xf32>
    %41 = arith.mulf %36, %40 : vector<2x32xf32>
    %42 = arith.addf %38, %41 : vector<2x32xf32>
    %43 = math.tanh %42 : vector<2x32xf32>
    %cst_17 = arith.constant 1.000000e+00 : f32
    %44 = vector.broadcast %cst_17 : f32 to vector<2x32xf32>
    %45 = arith.subf %44, %37 : vector<2x32xf32>
    %46 = arith.mulf %45, %43 : vector<2x32xf32>
    %47 = arith.mulf %37, %22 : vector<2x32xf32>
    %48 = arith.addf %46, %47 : vector<2x32xf32>
    %49 = tpu.concatenate %48, %23 in 1 : vector<2x32xf32>, vector<2x32xf32> -> vector<2x64xf32>
    %50 = arith.truncf %49 : vector<2x64xf32> to vector<2x64xbf16>
    %cst_18 = arith.constant dense<0.000000e+00> : vector<2x224xf32>
    %51 = tpu.matmul %50, %21, %cst_18 {dimension_numbers = #tpu.dot_dimension_numbers<[1], [0], [0], [1], [0, 0, 1, 1], [], []>} : vector<2x64xbf16>, vector<64x224xbf16>, vector<2x224xf32> -> vector<2x224xf32>
    %52 = vector.extract_strided_slice %51 {offsets = [0, 96], sizes = [2, 128], strides = [1, 1]} : vector<2x224xf32> to vector<2x128xf32>
    %53 = arith.addf %52, %20 : vector<2x128xf32>
    %54 = vector.extract_strided_slice %53 {offsets = [0, 0], sizes = [2, 64], strides = [1, 1]} : vector<2x128xf32> to vector<2x64xf32>
    %55 = arith.negf %54 : vector<2x64xf32>
    %56 = math.exp %55 : vector<2x64xf32>
    %cst_19 = arith.constant 1.000000e+00 : f32
    %57 = vector.broadcast %cst_19 : f32 to vector<2x64xf32>
    %58 = arith.addf %57, %56 : vector<2x64xf32>
    %59 = arith.divf %57, %58 : vector<2x64xf32>
    %60 = vector.extract_strided_slice %59 {offsets = [0, 0], sizes = [2, 32], strides = [1, 1]} : vector<2x64xf32> to vector<2x32xf32>
    %61 = vector.extract_strided_slice %59 {offsets = [0, 32], sizes = [2, 32], strides = [1, 1]} : vector<2x64xf32> to vector<2x32xf32>
    %62 = vector.extract_strided_slice %53 {offsets = [0, 64], sizes = [2, 32], strides = [1, 1]} : vector<2x128xf32> to vector<2x32xf32>
    %63 = vector.extract_strided_slice %53 {offsets = [0, 96], sizes = [2, 32], strides = [1, 1]} : vector<2x128xf32> to vector<2x32xf32>
    %64 = arith.mulf %60, %63 : vector<2x32xf32>
    %65 = arith.addf %62, %64 : vector<2x32xf32>
    %66 = math.tanh %65 : vector<2x32xf32>
    %cst_20 = arith.constant 1.000000e+00 : f32
    %67 = vector.broadcast %cst_20 : f32 to vector<2x32xf32>
    %68 = arith.subf %67, %61 : vector<2x32xf32>
    %69 = arith.mulf %68, %66 : vector<2x32xf32>
    %70 = arith.mulf %61, %23 : vector<2x32xf32>
    %71 = arith.addf %69, %70 : vector<2x32xf32>
    %c0_21 = arith.constant 0 : index
    %c0_22 = arith.constant 0 : index
    %72 = vector.load %arg6[%c0_21, %c0_22] : memref<16x32xf32, #tpu.memory_space<vmem>>, vector<2x32xf32>
    tpu.vector_store %arg6[%c0_21, %c0_22], %71 {strides = array<i32>} : memref<16x32xf32, #tpu.memory_space<vmem>>, vector<2x32xf32>,
    %73 = vector.extract_strided_slice %14 {offsets = [2, 0], sizes = [2, 96], strides = [1, 1]} : vector<16x96xf32> to vector<2x96xf32>
    %74 = vector.extract_strided_slice %73 {offsets = [0, 0], sizes = [2, 64], strides = [1, 1]} : vector<2x96xf32> to vector<2x64xf32>
    %75 = vector.extract_strided_slice %51 {offsets = [0, 0], sizes = [2, 64], strides = [1, 1]} : vector<2x224xf32> to vector<2x64xf32>
    %76 = arith.addf %74, %75 : vector<2x64xf32>
    %77 = arith.negf %76 : vector<2x64xf32>
    %78 = math.exp %77 : vector<2x64xf32>
    %cst_23 = arith.constant 1.000000e+00 : f32
    %79 = vector.broadcast %cst_23 : f32 to vector<2x64xf32>
    %80 = arith.addf %79, %78 : vector<2x64xf32>
    %81 = arith.divf %79, %80 : vector<2x64xf32>
    %82 = vector.extract_strided_slice %81 {offsets = [0, 0], sizes = [2, 32], strides = [1, 1]} : vector<2x64xf32> to vector<2x32xf32>
    %83 = vector.extract_strided_slice %81 {offsets = [0, 32], sizes = [2, 32], strides = [1, 1]} : vector<2x64xf32> to vector<2x32xf32>
    %84 = vector.extract_strided_slice %73 {offsets = [0, 64], sizes = [2, 32], strides = [1, 1]} : vector<2x96xf32> to vector<2x32xf32>
    %85 = vector.extract_strided_slice %51 {offsets = [0, 64], sizes = [2, 32], strides = [1, 1]} : vector<2x224xf32> to vector<2x32xf32>
    %86 = arith.addf %85, %17 : vector<2x32xf32>
    %87 = arith.mulf %82, %86 : vector<2x32xf32>
    %88 = arith.addf %84, %87 : vector<2x32xf32>
    %89 = math.tanh %88 : vector<2x32xf32>
    %cst_24 = arith.constant 1.000000e+00 : f32
    %90 = vector.broadcast %cst_24 : f32 to vector<2x32xf32>
    %91 = arith.subf %90, %83 : vector<2x32xf32>
    %92 = arith.mulf %91, %89 : vector<2x32xf32>
    %93 = arith.mulf %83, %48 : vector<2x32xf32>
    %94 = arith.addf %92, %93 : vector<2x32xf32>
    %95 = tpu.concatenate %94, %71 in 1 : vector<2x32xf32>, vector<2x32xf32> -> vector<2x64xf32>
    %96 = arith.truncf %95 : vector<2x64xf32> to vector<2x64xbf16>
    %cst_25 = arith.constant dense<0.000000e+00> : vector<2x224xf32>
    %97 = tpu.matmul %96, %21, %cst_25 {dimension_numbers = #tpu.dot_dimension_numbers<[1], [0], [0], [1], [0, 0, 1, 1], [], []>} : vector<2x64xbf16>, vector<64x224xbf16>, vector<2x224xf32> -> vector<2x224xf32>
    %98 = vector.extract_strided_slice %97 {offsets = [0, 96], sizes = [2, 128], strides = [1, 1]} : vector<2x224xf32> to vector<2x128xf32>
    %99 = arith.addf %98, %20 : vector<2x128xf32>
    %100 = vector.extract_strided_slice %99 {offsets = [0, 0], sizes = [2, 64], strides = [1, 1]} : vector<2x128xf32> to vector<2x64xf32>
    %101 = arith.negf %100 : vector<2x64xf32>
    %102 = math.exp %101 : vector<2x64xf32>
    %cst_26 = arith.constant 1.000000e+00 : f32
    %103 = vector.broadcast %cst_26 : f32 to vector<2x64xf32>
    %104 = arith.addf %103, %102 : vector<2x64xf32>
    %105 = arith.divf %103, %104 : vector<2x64xf32>
    %106 = vector.extract_strided_slice %105 {offsets = [0, 0], sizes = [2, 32], strides = [1, 1]} : vector<2x64xf32> to vector<2x32xf32>
    %107 = vector.extract_strided_slice %105 {offsets = [0, 32], sizes = [2, 32], strides = [1, 1]} : vector<2x64xf32> to vector<2x32xf32>
    %108 = vector.extract_strided_slice %99 {offsets = [0, 64], sizes = [2, 32], strides = [1, 1]} : vector<2x128xf32> to vector<2x32xf32>
    %109 = vector.extract_strided_slice %99 {offsets = [0, 96], sizes = [2, 32], strides = [1, 1]} : vector<2x128xf32> to vector<2x32xf32>
    %110 = arith.mulf %106, %109 : vector<2x32xf32>
    %111 = arith.addf %108, %110 : vector<2x32xf32>
    %112 = math.tanh %111 : vector<2x32xf32>
    %cst_27 = arith.constant 1.000000e+00 : f32
    %113 = vector.broadcast %cst_27 : f32 to vector<2x32xf32>
    %114 = arith.subf %113, %107 : vector<2x32xf32>
    %115 = arith.mulf %114, %112 : vector<2x32xf32>
    %116 = arith.mulf %107, %71 : vector<2x32xf32>
    %117 = arith.addf %115, %116 : vector<2x32xf32>
    %c2_28 = arith.constant 2 : index
    %c0_29 = arith.constant 0 : index
    %118 = vector.load %arg6[%c2_28, %c0_29] : memref<16x32xf32, #tpu.memory_space<vmem>>, vector<2x32xf32>
    tpu.vector_store %arg6[%c2_28, %c0_29], %117 {strides = array<i32>} : memref<16x32xf32, #tpu.memory_space<vmem>>, vector<2x32xf32>,
    %119 = vector.extract_strided_slice %14 {offsets = [4, 0], sizes = [2, 96], strides = [1, 1]} : vector<16x96xf32> to vector<2x96xf32>
    %120 = vector.extract_strided_slice %119 {offsets = [0, 0], sizes = [2, 64], strides = [1, 1]} : vector<2x96xf32> to vector<2x64xf32>
    %121 = vector.extract_strided_slice %97 {offsets = [0, 0], sizes = [2, 64], strides = [1, 1]} : vector<2x224xf32> to vector<2x64xf32>
    %122 = arith.addf %120, %121 : vector<2x64xf32>
    %123 = arith.negf %122 : vector<2x64xf32>
    %124 = math.exp %123 : vector<2x64xf32>
    %cst_30 = arith.constant 1.000000e+00 : f32
    %125 = vector.broadcast %cst_30 : f32 to vector<2x64xf32>
    %126 = arith.addf %125, %124 : vector<2x64xf32>
    %127 = arith.divf %125, %126 : vector<2x64xf32>
    %128 = vector.extract_strided_slice %127 {offsets = [0, 0], sizes = [2, 32], strides = [1, 1]} : vector<2x64xf32> to vector<2x32xf32>
    %129 = vector.extract_strided_slice %127 {offsets = [0, 32], sizes = [2, 32], strides = [1, 1]} : vector<2x64xf32> to vector<2x32xf32>
    %130 = vector.extract_strided_slice %119 {offsets = [0, 64], sizes = [2, 32], strides = [1, 1]} : vector<2x96xf32> to vector<2x32xf32>
    %131 = vector.extract_strided_slice %97 {offsets = [0, 64], sizes = [2, 32], strides = [1, 1]} : vector<2x224xf32> to vector<2x32xf32>
    %132 = arith.addf %131, %17 : vector<2x32xf32>
    %133 = arith.mulf %128, %132 : vector<2x32xf32>
    %134 = arith.addf %130, %133 : vector<2x32xf32>
    %135 = math.tanh %134 : vector<2x32xf32>
    %cst_31 = arith.constant 1.000000e+00 : f32
    %136 = vector.broadcast %cst_31 : f32 to vector<2x32xf32>
    %137 = arith.subf %136, %129 : vector<2x32xf32>
    %138 = arith.mulf %137, %135 : vector<2x32xf32>
    %139 = arith.mulf %129, %94 : vector<2x32xf32>
    %140 = arith.addf %138, %139 : vector<2x32xf32>
    %141 = tpu.concatenate %140, %117 in 1 : vector<2x32xf32>, vector<2x32xf32> -> vector<2x64xf32>
    %142 = arith.truncf %141 : vector<2x64xf32> to vector<2x64xbf16>
    %cst_32 = arith.constant dense<0.000000e+00> : vector<2x224xf32>
    %143 = tpu.matmul %142, %21, %cst_32 {dimension_numbers = #tpu.dot_dimension_numbers<[1], [0], [0], [1], [0, 0, 1, 1], [], []>} : vector<2x64xbf16>, vector<64x224xbf16>, vector<2x224xf32> -> vector<2x224xf32>
    %144 = vector.extract_strided_slice %143 {offsets = [0, 96], sizes = [2, 128], strides = [1, 1]} : vector<2x224xf32> to vector<2x128xf32>
    %145 = arith.addf %144, %20 : vector<2x128xf32>
    %146 = vector.extract_strided_slice %145 {offsets = [0, 0], sizes = [2, 64], strides = [1, 1]} : vector<2x128xf32> to vector<2x64xf32>
    %147 = arith.negf %146 : vector<2x64xf32>
    %148 = math.exp %147 : vector<2x64xf32>
    %cst_33 = arith.constant 1.000000e+00 : f32
    %149 = vector.broadcast %cst_33 : f32 to vector<2x64xf32>
    %150 = arith.addf %149, %148 : vector<2x64xf32>
    %151 = arith.divf %149, %150 : vector<2x64xf32>
    %152 = vector.extract_strided_slice %151 {offsets = [0, 0], sizes = [2, 32], strides = [1, 1]} : vector<2x64xf32> to vector<2x32xf32>
    %153 = vector.extract_strided_slice %151 {offsets = [0, 32], sizes = [2, 32], strides = [1, 1]} : vector<2x64xf32> to vector<2x32xf32>
    %154 = vector.extract_strided_slice %145 {offsets = [0, 64], sizes = [2, 32], strides = [1, 1]} : vector<2x128xf32> to vector<2x32xf32>
    %155 = vector.extract_strided_slice %145 {offsets = [0, 96], sizes = [2, 32], strides = [1, 1]} : vector<2x128xf32> to vector<2x32xf32>
    %156 = arith.mulf %152, %155 : vector<2x32xf32>
    %157 = arith.addf %154, %156 : vector<2x32xf32>
    %158 = math.tanh %157 : vector<2x32xf32>
    %cst_34 = arith.constant 1.000000e+00 : f32
    %159 = vector.broadcast %cst_34 : f32 to vector<2x32xf32>
    %160 = arith.subf %159, %153 : vector<2x32xf32>
    %161 = arith.mulf %160, %158 : vector<2x32xf32>
    %162 = arith.mulf %153, %117 : vector<2x32xf32>
    %163 = arith.addf %161, %162 : vector<2x32xf32>
    %c4 = arith.constant 4 : index
    %c0_35 = arith.constant 0 : index
    %164 = vector.load %arg6[%c4, %c0_35] : memref<16x32xf32, #tpu.memory_space<vmem>>, vector<2x32xf32>
    tpu.vector_store %arg6[%c4, %c0_35], %163 {strides = array<i32>} : memref<16x32xf32, #tpu.memory_space<vmem>>, vector<2x32xf32>,
    %165 = vector.extract_strided_slice %14 {offsets = [6, 0], sizes = [2, 96], strides = [1, 1]} : vector<16x96xf32> to vector<2x96xf32>
    %166 = vector.extract_strided_slice %165 {offsets = [0, 0], sizes = [2, 64], strides = [1, 1]} : vector<2x96xf32> to vector<2x64xf32>
    %167 = vector.extract_strided_slice %143 {offsets = [0, 0], sizes = [2, 64], strides = [1, 1]} : vector<2x224xf32> to vector<2x64xf32>
    %168 = arith.addf %166, %167 : vector<2x64xf32>
    %169 = arith.negf %168 : vector<2x64xf32>
    %170 = math.exp %169 : vector<2x64xf32>
    %cst_36 = arith.constant 1.000000e+00 : f32
    %171 = vector.broadcast %cst_36 : f32 to vector<2x64xf32>
    %172 = arith.addf %171, %170 : vector<2x64xf32>
    %173 = arith.divf %171, %172 : vector<2x64xf32>
    %174 = vector.extract_strided_slice %173 {offsets = [0, 0], sizes = [2, 32], strides = [1, 1]} : vector<2x64xf32> to vector<2x32xf32>
    %175 = vector.extract_strided_slice %173 {offsets = [0, 32], sizes = [2, 32], strides = [1, 1]} : vector<2x64xf32> to vector<2x32xf32>
    %176 = vector.extract_strided_slice %165 {offsets = [0, 64], sizes = [2, 32], strides = [1, 1]} : vector<2x96xf32> to vector<2x32xf32>
    %177 = vector.extract_strided_slice %143 {offsets = [0, 64], sizes = [2, 32], strides = [1, 1]} : vector<2x224xf32> to vector<2x32xf32>
    %178 = arith.addf %177, %17 : vector<2x32xf32>
    %179 = arith.mulf %174, %178 : vector<2x32xf32>
    %180 = arith.addf %176, %179 : vector<2x32xf32>
    %181 = math.tanh %180 : vector<2x32xf32>
    %cst_37 = arith.constant 1.000000e+00 : f32
    %182 = vector.broadcast %cst_37 : f32 to vector<2x32xf32>
    %183 = arith.subf %182, %175 : vector<2x32xf32>
    %184 = arith.mulf %183, %181 : vector<2x32xf32>
    %185 = arith.mulf %175, %140 : vector<2x32xf32>
    %186 = arith.addf %184, %185 : vector<2x32xf32>
    %187 = tpu.concatenate %186, %163 in 1 : vector<2x32xf32>, vector<2x32xf32> -> vector<2x64xf32>
    %188 = arith.truncf %187 : vector<2x64xf32> to vector<2x64xbf16>
    %cst_38 = arith.constant dense<0.000000e+00> : vector<2x224xf32>
    %189 = tpu.matmul %188, %21, %cst_38 {dimension_numbers = #tpu.dot_dimension_numbers<[1], [0], [0], [1], [0, 0, 1, 1], [], []>} : vector<2x64xbf16>, vector<64x224xbf16>, vector<2x224xf32> -> vector<2x224xf32>
    %190 = vector.extract_strided_slice %189 {offsets = [0, 96], sizes = [2, 128], strides = [1, 1]} : vector<2x224xf32> to vector<2x128xf32>
    %191 = arith.addf %190, %20 : vector<2x128xf32>
    %192 = vector.extract_strided_slice %191 {offsets = [0, 0], sizes = [2, 64], strides = [1, 1]} : vector<2x128xf32> to vector<2x64xf32>
    %193 = arith.negf %192 : vector<2x64xf32>
    %194 = math.exp %193 : vector<2x64xf32>
    %cst_39 = arith.constant 1.000000e+00 : f32
    %195 = vector.broadcast %cst_39 : f32 to vector<2x64xf32>
    %196 = arith.addf %195, %194 : vector<2x64xf32>
    %197 = arith.divf %195, %196 : vector<2x64xf32>
    %198 = vector.extract_strided_slice %197 {offsets = [0, 0], sizes = [2, 32], strides = [1, 1]} : vector<2x64xf32> to vector<2x32xf32>
    %199 = vector.extract_strided_slice %197 {offsets = [0, 32], sizes = [2, 32], strides = [1, 1]} : vector<2x64xf32> to vector<2x32xf32>
    %200 = vector.extract_strided_slice %191 {offsets = [0, 64], sizes = [2, 32], strides = [1, 1]} : vector<2x128xf32> to vector<2x32xf32>
    %201 = vector.extract_strided_slice %191 {offsets = [0, 96], sizes = [2, 32], strides = [1, 1]} : vector<2x128xf32> to vector<2x32xf32>
    %202 = arith.mulf %198, %201 : vector<2x32xf32>
    %203 = arith.addf %200, %202 : vector<2x32xf32>
    %204 = math.tanh %203 : vector<2x32xf32>
    %cst_40 = arith.constant 1.000000e+00 : f32
    %205 = vector.broadcast %cst_40 : f32 to vector<2x32xf32>
    %206 = arith.subf %205, %199 : vector<2x32xf32>
    %207 = arith.mulf %206, %204 : vector<2x32xf32>
    %208 = arith.mulf %199, %163 : vector<2x32xf32>
    %209 = arith.addf %207, %208 : vector<2x32xf32>
    %c6 = arith.constant 6 : index
    %c0_41 = arith.constant 0 : index
    %210 = vector.load %arg6[%c6, %c0_41] : memref<16x32xf32, #tpu.memory_space<vmem>>, vector<2x32xf32>
    tpu.vector_store %arg6[%c6, %c0_41], %209 {strides = array<i32>} : memref<16x32xf32, #tpu.memory_space<vmem>>, vector<2x32xf32>,
    %211 = vector.extract_strided_slice %14 {offsets = [8, 0], sizes = [2, 96], strides = [1, 1]} : vector<16x96xf32> to vector<2x96xf32>
    %212 = vector.extract_strided_slice %211 {offsets = [0, 0], sizes = [2, 64], strides = [1, 1]} : vector<2x96xf32> to vector<2x64xf32>
    %213 = vector.extract_strided_slice %189 {offsets = [0, 0], sizes = [2, 64], strides = [1, 1]} : vector<2x224xf32> to vector<2x64xf32>
    %214 = arith.addf %212, %213 : vector<2x64xf32>
    %215 = arith.negf %214 : vector<2x64xf32>
    %216 = math.exp %215 : vector<2x64xf32>
    %cst_42 = arith.constant 1.000000e+00 : f32
    %217 = vector.broadcast %cst_42 : f32 to vector<2x64xf32>
    %218 = arith.addf %217, %216 : vector<2x64xf32>
    %219 = arith.divf %217, %218 : vector<2x64xf32>
    %220 = vector.extract_strided_slice %219 {offsets = [0, 0], sizes = [2, 32], strides = [1, 1]} : vector<2x64xf32> to vector<2x32xf32>
    %221 = vector.extract_strided_slice %219 {offsets = [0, 32], sizes = [2, 32], strides = [1, 1]} : vector<2x64xf32> to vector<2x32xf32>
    %222 = vector.extract_strided_slice %211 {offsets = [0, 64], sizes = [2, 32], strides = [1, 1]} : vector<2x96xf32> to vector<2x32xf32>
    %223 = vector.extract_strided_slice %189 {offsets = [0, 64], sizes = [2, 32], strides = [1, 1]} : vector<2x224xf32> to vector<2x32xf32>
    %224 = arith.addf %223, %17 : vector<2x32xf32>
    %225 = arith.mulf %220, %224 : vector<2x32xf32>
    %226 = arith.addf %222, %225 : vector<2x32xf32>
    %227 = math.tanh %226 : vector<2x32xf32>
    %cst_43 = arith.constant 1.000000e+00 : f32
    %228 = vector.broadcast %cst_43 : f32 to vector<2x32xf32>
    %229 = arith.subf %228, %221 : vector<2x32xf32>
    %230 = arith.mulf %229, %227 : vector<2x32xf32>
    %231 = arith.mulf %221, %186 : vector<2x32xf32>
    %232 = arith.addf %230, %231 : vector<2x32xf32>
    %233 = tpu.concatenate %232, %209 in 1 : vector<2x32xf32>, vector<2x32xf32> -> vector<2x64xf32>
    %234 = arith.truncf %233 : vector<2x64xf32> to vector<2x64xbf16>
    %cst_44 = arith.constant dense<0.000000e+00> : vector<2x224xf32>
    %235 = tpu.matmul %234, %21, %cst_44 {dimension_numbers = #tpu.dot_dimension_numbers<[1], [0], [0], [1], [0, 0, 1, 1], [], []>} : vector<2x64xbf16>, vector<64x224xbf16>, vector<2x224xf32> -> vector<2x224xf32>
    %236 = vector.extract_strided_slice %235 {offsets = [0, 96], sizes = [2, 128], strides = [1, 1]} : vector<2x224xf32> to vector<2x128xf32>
    %237 = arith.addf %236, %20 : vector<2x128xf32>
    %238 = vector.extract_strided_slice %237 {offsets = [0, 0], sizes = [2, 64], strides = [1, 1]} : vector<2x128xf32> to vector<2x64xf32>
    %239 = arith.negf %238 : vector<2x64xf32>
    %240 = math.exp %239 : vector<2x64xf32>
    %cst_45 = arith.constant 1.000000e+00 : f32
    %241 = vector.broadcast %cst_45 : f32 to vector<2x64xf32>
    %242 = arith.addf %241, %240 : vector<2x64xf32>
    %243 = arith.divf %241, %242 : vector<2x64xf32>
    %244 = vector.extract_strided_slice %243 {offsets = [0, 0], sizes = [2, 32], strides = [1, 1]} : vector<2x64xf32> to vector<2x32xf32>
    %245 = vector.extract_strided_slice %243 {offsets = [0, 32], sizes = [2, 32], strides = [1, 1]} : vector<2x64xf32> to vector<2x32xf32>
    %246 = vector.extract_strided_slice %237 {offsets = [0, 64], sizes = [2, 32], strides = [1, 1]} : vector<2x128xf32> to vector<2x32xf32>
    %247 = vector.extract_strided_slice %237 {offsets = [0, 96], sizes = [2, 32], strides = [1, 1]} : vector<2x128xf32> to vector<2x32xf32>
    %248 = arith.mulf %244, %247 : vector<2x32xf32>
    %249 = arith.addf %246, %248 : vector<2x32xf32>
    %250 = math.tanh %249 : vector<2x32xf32>
    %cst_46 = arith.constant 1.000000e+00 : f32
    %251 = vector.broadcast %cst_46 : f32 to vector<2x32xf32>
    %252 = arith.subf %251, %245 : vector<2x32xf32>
    %253 = arith.mulf %252, %250 : vector<2x32xf32>
    %254 = arith.mulf %245, %209 : vector<2x32xf32>
    %255 = arith.addf %253, %254 : vector<2x32xf32>
    %c8 = arith.constant 8 : index
    %c0_47 = arith.constant 0 : index
    %256 = vector.load %arg6[%c8, %c0_47] : memref<16x32xf32, #tpu.memory_space<vmem>>, vector<2x32xf32>
    tpu.vector_store %arg6[%c8, %c0_47], %255 {strides = array<i32>} : memref<16x32xf32, #tpu.memory_space<vmem>>, vector<2x32xf32>,
    %257 = vector.extract_strided_slice %14 {offsets = [10, 0], sizes = [2, 96], strides = [1, 1]} : vector<16x96xf32> to vector<2x96xf32>
    %258 = vector.extract_strided_slice %257 {offsets = [0, 0], sizes = [2, 64], strides = [1, 1]} : vector<2x96xf32> to vector<2x64xf32>
    %259 = vector.extract_strided_slice %235 {offsets = [0, 0], sizes = [2, 64], strides = [1, 1]} : vector<2x224xf32> to vector<2x64xf32>
    %260 = arith.addf %258, %259 : vector<2x64xf32>
    %261 = arith.negf %260 : vector<2x64xf32>
    %262 = math.exp %261 : vector<2x64xf32>
    %cst_48 = arith.constant 1.000000e+00 : f32
    %263 = vector.broadcast %cst_48 : f32 to vector<2x64xf32>
    %264 = arith.addf %263, %262 : vector<2x64xf32>
    %265 = arith.divf %263, %264 : vector<2x64xf32>
    %266 = vector.extract_strided_slice %265 {offsets = [0, 0], sizes = [2, 32], strides = [1, 1]} : vector<2x64xf32> to vector<2x32xf32>
    %267 = vector.extract_strided_slice %265 {offsets = [0, 32], sizes = [2, 32], strides = [1, 1]} : vector<2x64xf32> to vector<2x32xf32>
    %268 = vector.extract_strided_slice %257 {offsets = [0, 64], sizes = [2, 32], strides = [1, 1]} : vector<2x96xf32> to vector<2x32xf32>
    %269 = vector.extract_strided_slice %235 {offsets = [0, 64], sizes = [2, 32], strides = [1, 1]} : vector<2x224xf32> to vector<2x32xf32>
    %270 = arith.addf %269, %17 : vector<2x32xf32>
    %271 = arith.mulf %266, %270 : vector<2x32xf32>
    %272 = arith.addf %268, %271 : vector<2x32xf32>
    %273 = math.tanh %272 : vector<2x32xf32>
    %cst_49 = arith.constant 1.000000e+00 : f32
    %274 = vector.broadcast %cst_49 : f32 to vector<2x32xf32>
    %275 = arith.subf %274, %267 : vector<2x32xf32>
    %276 = arith.mulf %275, %273 : vector<2x32xf32>
    %277 = arith.mulf %267, %232 : vector<2x32xf32>
    %278 = arith.addf %276, %277 : vector<2x32xf32>
    %279 = tpu.concatenate %278, %255 in 1 : vector<2x32xf32>, vector<2x32xf32> -> vector<2x64xf32>
    %280 = arith.truncf %279 : vector<2x64xf32> to vector<2x64xbf16>
    %cst_50 = arith.constant dense<0.000000e+00> : vector<2x224xf32>
    %281 = tpu.matmul %280, %21, %cst_50 {dimension_numbers = #tpu.dot_dimension_numbers<[1], [0], [0], [1], [0, 0, 1, 1], [], []>} : vector<2x64xbf16>, vector<64x224xbf16>, vector<2x224xf32> -> vector<2x224xf32>
    %282 = vector.extract_strided_slice %281 {offsets = [0, 96], sizes = [2, 128], strides = [1, 1]} : vector<2x224xf32> to vector<2x128xf32>
    %283 = arith.addf %282, %20 : vector<2x128xf32>
    %284 = vector.extract_strided_slice %283 {offsets = [0, 0], sizes = [2, 64], strides = [1, 1]} : vector<2x128xf32> to vector<2x64xf32>
    %285 = arith.negf %284 : vector<2x64xf32>
    %286 = math.exp %285 : vector<2x64xf32>
    %cst_51 = arith.constant 1.000000e+00 : f32
    %287 = vector.broadcast %cst_51 : f32 to vector<2x64xf32>
    %288 = arith.addf %287, %286 : vector<2x64xf32>
    %289 = arith.divf %287, %288 : vector<2x64xf32>
    %290 = vector.extract_strided_slice %289 {offsets = [0, 0], sizes = [2, 32], strides = [1, 1]} : vector<2x64xf32> to vector<2x32xf32>
    %291 = vector.extract_strided_slice %289 {offsets = [0, 32], sizes = [2, 32], strides = [1, 1]} : vector<2x64xf32> to vector<2x32xf32>
    %292 = vector.extract_strided_slice %283 {offsets = [0, 64], sizes = [2, 32], strides = [1, 1]} : vector<2x128xf32> to vector<2x32xf32>
    %293 = vector.extract_strided_slice %283 {offsets = [0, 96], sizes = [2, 32], strides = [1, 1]} : vector<2x128xf32> to vector<2x32xf32>
    %294 = arith.mulf %290, %293 : vector<2x32xf32>
    %295 = arith.addf %292, %294 : vector<2x32xf32>
    %296 = math.tanh %295 : vector<2x32xf32>
    %cst_52 = arith.constant 1.000000e+00 : f32
    %297 = vector.broadcast %cst_52 : f32 to vector<2x32xf32>
    %298 = arith.subf %297, %291 : vector<2x32xf32>
    %299 = arith.mulf %298, %296 : vector<2x32xf32>
    %300 = arith.mulf %291, %255 : vector<2x32xf32>
    %301 = arith.addf %299, %300 : vector<2x32xf32>
    %c10 = arith.constant 10 : index
    %c0_53 = arith.constant 0 : index
    %302 = vector.load %arg6[%c10, %c0_53] : memref<16x32xf32, #tpu.memory_space<vmem>>, vector<2x32xf32>
    tpu.vector_store %arg6[%c10, %c0_53], %301 {strides = array<i32>} : memref<16x32xf32, #tpu.memory_space<vmem>>, vector<2x32xf32>,
    %303 = vector.extract_strided_slice %14 {offsets = [12, 0], sizes = [2, 96], strides = [1, 1]} : vector<16x96xf32> to vector<2x96xf32>
    %304 = vector.extract_strided_slice %303 {offsets = [0, 0], sizes = [2, 64], strides = [1, 1]} : vector<2x96xf32> to vector<2x64xf32>
    %305 = vector.extract_strided_slice %281 {offsets = [0, 0], sizes = [2, 64], strides = [1, 1]} : vector<2x224xf32> to vector<2x64xf32>
    %306 = arith.addf %304, %305 : vector<2x64xf32>
    %307 = arith.negf %306 : vector<2x64xf32>
    %308 = math.exp %307 : vector<2x64xf32>
    %cst_54 = arith.constant 1.000000e+00 : f32
    %309 = vector.broadcast %cst_54 : f32 to vector<2x64xf32>
    %310 = arith.addf %309, %308 : vector<2x64xf32>
    %311 = arith.divf %309, %310 : vector<2x64xf32>
    %312 = vector.extract_strided_slice %311 {offsets = [0, 0], sizes = [2, 32], strides = [1, 1]} : vector<2x64xf32> to vector<2x32xf32>
    %313 = vector.extract_strided_slice %311 {offsets = [0, 32], sizes = [2, 32], strides = [1, 1]} : vector<2x64xf32> to vector<2x32xf32>
    %314 = vector.extract_strided_slice %303 {offsets = [0, 64], sizes = [2, 32], strides = [1, 1]} : vector<2x96xf32> to vector<2x32xf32>
    %315 = vector.extract_strided_slice %281 {offsets = [0, 64], sizes = [2, 32], strides = [1, 1]} : vector<2x224xf32> to vector<2x32xf32>
    %316 = arith.addf %315, %17 : vector<2x32xf32>
    %317 = arith.mulf %312, %316 : vector<2x32xf32>
    %318 = arith.addf %314, %317 : vector<2x32xf32>
    %319 = math.tanh %318 : vector<2x32xf32>
    %cst_55 = arith.constant 1.000000e+00 : f32
    %320 = vector.broadcast %cst_55 : f32 to vector<2x32xf32>
    %321 = arith.subf %320, %313 : vector<2x32xf32>
    %322 = arith.mulf %321, %319 : vector<2x32xf32>
    %323 = arith.mulf %313, %278 : vector<2x32xf32>
    %324 = arith.addf %322, %323 : vector<2x32xf32>
    %325 = tpu.concatenate %324, %301 in 1 : vector<2x32xf32>, vector<2x32xf32> -> vector<2x64xf32>
    %326 = arith.truncf %325 : vector<2x64xf32> to vector<2x64xbf16>
    %cst_56 = arith.constant dense<0.000000e+00> : vector<2x224xf32>
    %327 = tpu.matmul %326, %21, %cst_56 {dimension_numbers = #tpu.dot_dimension_numbers<[1], [0], [0], [1], [0, 0, 1, 1], [], []>} : vector<2x64xbf16>, vector<64x224xbf16>, vector<2x224xf32> -> vector<2x224xf32>
    %328 = vector.extract_strided_slice %327 {offsets = [0, 96], sizes = [2, 128], strides = [1, 1]} : vector<2x224xf32> to vector<2x128xf32>
    %329 = arith.addf %328, %20 : vector<2x128xf32>
    %330 = vector.extract_strided_slice %329 {offsets = [0, 0], sizes = [2, 64], strides = [1, 1]} : vector<2x128xf32> to vector<2x64xf32>
    %331 = arith.negf %330 : vector<2x64xf32>
    %332 = math.exp %331 : vector<2x64xf32>
    %cst_57 = arith.constant 1.000000e+00 : f32
    %333 = vector.broadcast %cst_57 : f32 to vector<2x64xf32>
    %334 = arith.addf %333, %332 : vector<2x64xf32>
    %335 = arith.divf %333, %334 : vector<2x64xf32>
    %336 = vector.extract_strided_slice %335 {offsets = [0, 0], sizes = [2, 32], strides = [1, 1]} : vector<2x64xf32> to vector<2x32xf32>
    %337 = vector.extract_strided_slice %335 {offsets = [0, 32], sizes = [2, 32], strides = [1, 1]} : vector<2x64xf32> to vector<2x32xf32>
    %338 = vector.extract_strided_slice %329 {offsets = [0, 64], sizes = [2, 32], strides = [1, 1]} : vector<2x128xf32> to vector<2x32xf32>
    %339 = vector.extract_strided_slice %329 {offsets = [0, 96], sizes = [2, 32], strides = [1, 1]} : vector<2x128xf32> to vector<2x32xf32>
    %340 = arith.mulf %336, %339 : vector<2x32xf32>
    %341 = arith.addf %338, %340 : vector<2x32xf32>
    %342 = math.tanh %341 : vector<2x32xf32>
    %cst_58 = arith.constant 1.000000e+00 : f32
    %343 = vector.broadcast %cst_58 : f32 to vector<2x32xf32>
    %344 = arith.subf %343, %337 : vector<2x32xf32>
    %345 = arith.mulf %344, %342 : vector<2x32xf32>
    %346 = arith.mulf %337, %301 : vector<2x32xf32>
    %347 = arith.addf %345, %346 : vector<2x32xf32>
    %c12 = arith.constant 12 : index
    %c0_59 = arith.constant 0 : index
    %348 = vector.load %arg6[%c12, %c0_59] : memref<16x32xf32, #tpu.memory_space<vmem>>, vector<2x32xf32>
    tpu.vector_store %arg6[%c12, %c0_59], %347 {strides = array<i32>} : memref<16x32xf32, #tpu.memory_space<vmem>>, vector<2x32xf32>,
    %349 = vector.extract_strided_slice %14 {offsets = [14, 0], sizes = [2, 96], strides = [1, 1]} : vector<16x96xf32> to vector<2x96xf32>
    %350 = vector.extract_strided_slice %349 {offsets = [0, 0], sizes = [2, 64], strides = [1, 1]} : vector<2x96xf32> to vector<2x64xf32>
    %351 = vector.extract_strided_slice %327 {offsets = [0, 0], sizes = [2, 64], strides = [1, 1]} : vector<2x224xf32> to vector<2x64xf32>
    %352 = arith.addf %350, %351 : vector<2x64xf32>
    %353 = arith.negf %352 : vector<2x64xf32>
    %354 = math.exp %353 : vector<2x64xf32>
    %cst_60 = arith.constant 1.000000e+00 : f32
    %355 = vector.broadcast %cst_60 : f32 to vector<2x64xf32>
    %356 = arith.addf %355, %354 : vector<2x64xf32>
    %357 = arith.divf %355, %356 : vector<2x64xf32>
    %358 = vector.extract_strided_slice %357 {offsets = [0, 0], sizes = [2, 32], strides = [1, 1]} : vector<2x64xf32> to vector<2x32xf32>
    %359 = vector.extract_strided_slice %357 {offsets = [0, 32], sizes = [2, 32], strides = [1, 1]} : vector<2x64xf32> to vector<2x32xf32>
    %360 = vector.extract_strided_slice %349 {offsets = [0, 64], sizes = [2, 32], strides = [1, 1]} : vector<2x96xf32> to vector<2x32xf32>
    %361 = vector.extract_strided_slice %327 {offsets = [0, 64], sizes = [2, 32], strides = [1, 1]} : vector<2x224xf32> to vector<2x32xf32>
    %362 = arith.addf %361, %17 : vector<2x32xf32>
    %363 = arith.mulf %358, %362 : vector<2x32xf32>
    %364 = arith.addf %360, %363 : vector<2x32xf32>
    %365 = math.tanh %364 : vector<2x32xf32>
    %cst_61 = arith.constant 1.000000e+00 : f32
    %366 = vector.broadcast %cst_61 : f32 to vector<2x32xf32>
    %367 = arith.subf %366, %359 : vector<2x32xf32>
    %368 = arith.mulf %367, %365 : vector<2x32xf32>
    %369 = arith.mulf %359, %324 : vector<2x32xf32>
    %370 = arith.addf %368, %369 : vector<2x32xf32>
    %371 = tpu.concatenate %370, %347 in 1 : vector<2x32xf32>, vector<2x32xf32> -> vector<2x64xf32>
    %372 = arith.truncf %371 : vector<2x64xf32> to vector<2x64xbf16>
    %cst_62 = arith.constant dense<0.000000e+00> : vector<2x224xf32>
    %373 = tpu.matmul %372, %21, %cst_62 {dimension_numbers = #tpu.dot_dimension_numbers<[1], [0], [0], [1], [0, 0, 1, 1], [], []>} : vector<2x64xbf16>, vector<64x224xbf16>, vector<2x224xf32> -> vector<2x224xf32>
    %374 = vector.extract_strided_slice %373 {offsets = [0, 96], sizes = [2, 128], strides = [1, 1]} : vector<2x224xf32> to vector<2x128xf32>
    %375 = arith.addf %374, %20 : vector<2x128xf32>
    %376 = vector.extract_strided_slice %375 {offsets = [0, 0], sizes = [2, 64], strides = [1, 1]} : vector<2x128xf32> to vector<2x64xf32>
    %377 = arith.negf %376 : vector<2x64xf32>
    %378 = math.exp %377 : vector<2x64xf32>
    %cst_63 = arith.constant 1.000000e+00 : f32
    %379 = vector.broadcast %cst_63 : f32 to vector<2x64xf32>
    %380 = arith.addf %379, %378 : vector<2x64xf32>
    %381 = arith.divf %379, %380 : vector<2x64xf32>
    %382 = vector.extract_strided_slice %381 {offsets = [0, 0], sizes = [2, 32], strides = [1, 1]} : vector<2x64xf32> to vector<2x32xf32>
    %383 = vector.extract_strided_slice %381 {offsets = [0, 32], sizes = [2, 32], strides = [1, 1]} : vector<2x64xf32> to vector<2x32xf32>
    %384 = vector.extract_strided_slice %375 {offsets = [0, 64], sizes = [2, 32], strides = [1, 1]} : vector<2x128xf32> to vector<2x32xf32>
    %385 = vector.extract_strided_slice %375 {offsets = [0, 96], sizes = [2, 32], strides = [1, 1]} : vector<2x128xf32> to vector<2x32xf32>
    %386 = arith.mulf %382, %385 : vector<2x32xf32>
    %387 = arith.addf %384, %386 : vector<2x32xf32>
    %388 = math.tanh %387 : vector<2x32xf32>
    %cst_64 = arith.constant 1.000000e+00 : f32
    %389 = vector.broadcast %cst_64 : f32 to vector<2x32xf32>
    %390 = arith.subf %389, %383 : vector<2x32xf32>
    %391 = arith.mulf %390, %388 : vector<2x32xf32>
    %392 = arith.mulf %383, %347 : vector<2x32xf32>
    %393 = arith.addf %391, %392 : vector<2x32xf32>
    %c14 = arith.constant 14 : index
    %c0_65 = arith.constant 0 : index
    %394 = vector.load %arg6[%c14, %c0_65] : memref<16x32xf32, #tpu.memory_space<vmem>>, vector<2x32xf32>
    tpu.vector_store %arg6[%c14, %c0_65], %393 {strides = array<i32>} : memref<16x32xf32, #tpu.memory_space<vmem>>, vector<2x32xf32>,
    %c16 = arith.constant 16 : index
    %c0_66 = arith.constant 0 : index
    %395 = vector.load %arg5[%c16, %c0_66] : memref<20x32xf32, #tpu.memory_space<vmem>>, vector<2x32xf32>
    tpu.vector_store %arg5[%c16, %c0_66], %370 {strides = array<i32>} : memref<20x32xf32, #tpu.memory_space<vmem>>, vector<2x32xf32>,
    %c18 = arith.constant 18 : index
    %c0_67 = arith.constant 0 : index
    %396 = vector.load %arg5[%c18, %c0_67] : memref<20x32xf32, #tpu.memory_space<vmem>>, vector<2x32xf32>
    tpu.vector_store %arg5[%c18, %c0_67], %393 {strides = array<i32>} : memref<20x32xf32, #tpu.memory_space<vmem>>, vector<2x32xf32>,
    %c0_68 = arith.constant 0 : index
    %c0_69 = arith.constant 0 : index
    %397 = vector.load %arg6[%c0_68, %c0_69] : memref<16x32xf32, #tpu.memory_space<vmem>>, vector<16x32xf32>
    %c40 = arith.constant 40 : index
    %c0_70 = arith.constant 0 : index
    %398 = vector.load %arg3[%c40, %c0_70] : memref<96x128xf32, #tpu.memory_space<vmem>>, vector<32x16xf32>
    %cst_71 = arith.constant dense<0.000000e+00> : vector<16x16xf32>
    %399 = tpu.matmul %397, %398, %cst_71 {dimension_numbers = #tpu.dot_dimension_numbers<[1], [0], [0], [1], [0, 0, 1, 1], [], []>} : vector<16x32xf32>, vector<32x16xf32>, vector<16x16xf32> -> vector<16x16xf32>
    %c72 = arith.constant 72 : index
    %c0_72 = arith.constant 0 : index
    %400 = vector.load %arg3[%c72, %c0_72] : memref<96x128xf32, #tpu.memory_space<vmem>>, vector<1x16xf32>
    %401 = vector.broadcast %400 : vector<1x16xf32> to vector<16x16xf32>
    %402 = arith.addf %399, %401 : vector<16x16xf32>
    %403 = vector.extract_strided_slice %402 {offsets = [0, 0], sizes = [16, 13], strides = [1, 1]} : vector<16x16xf32> to vector<16x13xf32>
    %cst_73 = arith.constant dense<0xFF800000> : vector<16xf32>
    %404 = vector.multi_reduction <maximumf>, %403, %cst_73 [1] : vector<16x13xf32> to vector<16xf32>
    %405 = vector.shape_cast %404 : vector<16xf32> to vector<16x1xf32>
    %406 = vector.broadcast %405 : vector<16x1xf32> to vector<16x13xf32>
    %407 = arith.subf %403, %406 : vector<16x13xf32>
    %408 = math.exp %407 : vector<16x13xf32>
    %cst_74 = arith.constant dense<0.000000e+00> : vector<16xf32>
    %409 = vector.multi_reduction <add>, %408, %cst_74 [1] : vector<16x13xf32> to vector<16xf32>
    %410 = vector.shape_cast %409 : vector<16xf32> to vector<16x1xf32>
    %411 = tpu.reciprocal %410 {approx = true} : vector<16x1xf32> -> vector<16x1xf32>
    %412 = vector.broadcast %411 : vector<16x1xf32> to vector<16x13xf32>
    %413 = arith.mulf %408, %412 : vector<16x13xf32>
    %c80 = arith.constant 80 : index
    %c0_75 = arith.constant 0 : index
    %414 = vector.load %arg3[%c80, %c0_75] : memref<96x128xf32, #tpu.memory_space<vmem>>, vector<13x8xf32>
    %cst_76 = arith.constant dense<0.000000e+00> : vector<16x8xf32>
    %415 = tpu.matmul %413, %414, %cst_76 {dimension_numbers = #tpu.dot_dimension_numbers<[1], [0], [0], [1], [0, 0, 1, 1], [], []>} : vector<16x13xf32>, vector<13x8xf32>, vector<16x8xf32> -> vector<16x8xf32>
    %c93 = arith.constant 93 : index
    %c0_77 = arith.constant 0 : index
    %416 = vector.load %arg3[%c93, %c0_77] : memref<96x128xf32, #tpu.memory_space<vmem>>, vector<1x8xf32>
    %417 = vector.broadcast %416 : vector<1x8xf32> to vector<16x8xf32>
    %418 = arith.addf %415, %417 : vector<16x8xf32>
    %cst_78 = arith.constant 0.000000e+00 : f32
    %419 = vector.broadcast %cst_78 : f32 to vector<16x8xf32>
    %420 = arith.maximumf %418, %419 : vector<16x8xf32>
    %421 = tpu.concatenate %402, %420 in 1 : vector<16x16xf32>, vector<16x8xf32> -> vector<16x24xf32>
    %c0_79 = arith.constant 0 : index
    %c0_80 = arith.constant 0 : index
    %422 = vector.load %arg5[%c0_79, %c0_80] : memref<20x32xf32, #tpu.memory_space<vmem>>, vector<16x24xf32>
    tpu.vector_store %arg5[%c0_79, %c0_80], %421 {strides = array<i32>} : memref<20x32xf32, #tpu.memory_space<vmem>>, vector<16x24xf32>,
    return
  }
}

</mosaic_0001>

<llo_original>
// kernel: rql_compensating2_forward.1
$region0: #{rql_compensating2_forward.1}
  #allocation0 [shape = 'u32[]', space=smem, size = 0x4, offset = 0x4, fixed_abs, tag = 'smem constant byte address 0x4 - core index']
  #allocation1 [shape = 'u32[144,128]{1,0:T(1,128)}', space=vmem, size = 0x12000, scoped, tag = 'internal scratch']
  #allocation2 [shape = 'f32[16,32]{1,0:T(8,128)}', space=vmem, size = 0x2000, scoped, tag = 'scratch operand']
  %s0 = inlined_call_operand.vmem [shape: s32[16,1], index: 0, kind: input, shape index: {}]
  %s1 = inlined_call_operand.vmem [shape: f32[16,8], index: 1, kind: input, shape index: {}]
  %s2 = inlined_call_operand.vmem [shape: f32[4,32], index: 2, kind: input, shape index: {}]
  %s3 = inlined_call_operand.hbm [shape: f32[96,128], index: 3, kind: input, shape index: {}]
  %s4 = inlined_call_operand.hbm [shape: bf16[64,224], index: 4, kind: input, shape index: {}]
  %s5 = inlined_call_operand.vmem [shape: f32[20,32], index: 5, kind: output, shape index: {}]
  %s6 = sld [smem:[#allocation0]]
  $region38: #{rql_compensating2_forward.1} parent=0
    _
  %s8 = ssub.s32 1, %s6
  %s9 = scalar_select 0, %s8, %s6
  $region1: #{rql_compensating2_forward.1} parent=0
    #allocation3 [shape = 'u8[49152]{0}', space=vmem, size = 0xc000, scoped, tag = 'input window, operand 3, single buffered']
    #allocation4 [shape = 's32[1]{0}', space=sflag, size = 0x4, scoped, tag = 'scoped memory for rql_compensating2_forward.1']
    #allocation5 [shape = 'u8[32768]{0}', space=vmem, size = 0x8000, scoped, tag = 'input window, operand 4, single buffered']
    #allocation6 [shape = 's32[1]{0}', space=sflag, size = 0x4, scoped, tag = 'scoped memory for rql_compensating2_forward.1']
    %10 = vsyncpa [#allocation4], 0
    %11 = vsyncpa [#allocation6], 0
    // Predicated region
    $region2: #{rql_compensating2_forward.1} parent=1 // pred_check
      _
    $region3: #{rql_compensating2_forward.1} parent=1 // pred_check_branch
      %13 = sbr.rel (0) target = $region5
    $region4: #{rql_compensating2_forward.1} parent=1 // pred_region
      _
    $region5: #{rql_compensating2_forward.1} parent=1 // pred_fallthru
      _
    // Predicated region
    $region6: #{rql_compensating2_forward.1} parent=1 // pred_check
      _
    $region7: #{rql_compensating2_forward.1} parent=1 // pred_check_branch
      %15 = sbr.rel (0) target = $region9
    $region8: #{rql_compensating2_forward.1} parent=1 // pred_region
      _
    $region9: #{rql_compensating2_forward.1} parent=1 // pred_fallthru
      _
    // Predicated region
    $region10: #{rql_compensating2_forward.1} parent=1 // pred_check
      _
    $region11: #{rql_compensating2_forward.1} parent=1 // pred_check_branch
      %17 = sbr.rel (0) target = $region13
    $region12: #{rql_compensating2_forward.1} parent=1 // pred_region
      _
    $region13: #{rql_compensating2_forward.1} parent=1 // pred_fallthru
      _
    // Predicated region
    $region14: #{rql_compensating2_forward.1} parent=1 // pred_check
      _
    $region15: #{rql_compensating2_forward.1} parent=1 // pred_check_branch
      %19 = sbr.rel (0) target = $region17
    $region16: #{rql_compensating2_forward.1} parent=1 // pred_region
      %s21 = ssub.s32 1536, 1536
      %22 = vsyncadd [#allocation4], %s21
      %s23 = sshll.u32 [#allocation3], 4
      %s24 = int_to_ptr.vmem [resolvable:$true] %s23
      %29 = dma.hbm_to_vmem [thread:$0]  %s3, 1536, %s24, [#allocation4], 128, 128, 8
    $region17: #{rql_compensating2_forward.1} parent=1 // pred_fallthru
      _
    // Predicated region
    $region18: #{rql_compensating2_forward.1} parent=1 // pred_check
      _
    $region19: #{rql_compensating2_forward.1} parent=1 // pred_check_branch
      %31 = sbr.rel (0) target = $region21
    $region20: #{rql_compensating2_forward.1} parent=1 // pred_region
      %s33 = ssub.s32 1024, 1024
      %34 = vsyncadd [#allocation6], %s33
      %s35 = sshll.u32 [#allocation5], 4
      %s36 = int_to_ptr.vmem [resolvable:$true] %s35
      %41 = dma.hbm_to_vmem [thread:$0]  %s4, 1024, %s36, [#allocation6], 128, 128, 8
    $region21: #{rql_compensating2_forward.1} parent=1 // pred_fallthru
      _
    // Predicated region
    $region22: #{rql_compensating2_forward.1} parent=1 // pred_check
      _
    $region23: #{rql_compensating2_forward.1} parent=1 // pred_check_branch
      %43 = sbr.rel (0) target = $region25
    $region24: #{rql_compensating2_forward.1} parent=1 // pred_region
      %44 = dma.done [#allocation4], 1536
    $region25: #{rql_compensating2_forward.1} parent=1 // pred_fallthru
      _
    // Predicated region
    $region26: #{rql_compensating2_forward.1} parent=1 // pred_check
      _
    $region27: #{rql_compensating2_forward.1} parent=1 // pred_check_branch
      %46 = sbr.rel (0) target = $region29
    $region28: #{rql_compensating2_forward.1} parent=1 // pred_region
      %47 = dma.done [#allocation6], 1024
    $region29: #{rql_compensating2_forward.1} parent=1 // pred_fallthru
      _
    %v49 = vld [vmem:[%s0] sm:$0xff]
    %v50 = vld [vmem:[%s0 + $0x8] sm:$0xff]
    %v51 = vlaneseq
    %v52 = vand.u32 %v51, 127
    %53 = vset.pattern.permute.xlu0 0
    %54 = vperm.xlu0 %53, %v49
    %v55 = vpop.permute.xlu0 %54
    %56 = vset.pattern.permute.xlu0 0
    %57 = vperm.xlu0 %56, %v50
    %v58 = vpop.permute.xlu0 %57
    %vm59 = vcmp.eq.s32.totalorder %v52, %v55
    %vm60 = vcmp.eq.s32.totalorder %v52, %v58
    %v61 = vsel %vm59, 1, 0
    %v62 = vsel %vm60, 1, 0
    %v63 = vcvt.s32.f32 %v61
    %v64 = vcvt.s32.f32 %v62
    %v65 = vld [vmem:[#allocation3] sm:$0xff]
    %v66 = vld [vmem:[#allocation3 + $0x8] sm:$0xff]
    %v67 = vld [vmem:[#allocation3 + $0x10] sm:$0xf]
    %v68 = vld [vmem:[%s1] sm:$0xff]
    %v69 = vld [vmem:[%s1 + $0x8] sm:$0xff]
    %v70 = vld [vmem:[#allocation3 + $0x18] sm:$0xff]
    %vm71 = vcmask 64512
    %v73 = vsel %vm71, %v68, 0
    %v76 = vsel %vm71, %v69, 0
    %78 = vmatprep.subr.mxu0 0.0
    %79 = vmatpush1.msra.mxu0 0.0
    %80 = vmatprep.subr.mxu0 0.0
    %81 = vmatpush1.msra.mxu0 0.0
    %82 = vmatprep.subr.mxu0 0.0
    %83 = vmatpush1.msra.mxu0 0.0
    %84 = vmatprep.subr.mxu0 0.0
    %85 = vmatpush1.msra.mxu0 0.0
    %86 = vmatprep.subr.mxu0 0.0
    %87 = vmatpush1.msra.mxu0 0.0
    %88 = vmatprep.subr.mxu0 0.0
    %89 = vmatpush1.msra.mxu0 0.0
    %90 = vmatprep.subr.mxu0 0.0
    %91 = vmatpush1.msra.mxu0 0.0
    %92 = vmatprep.subr.mxu0 0.0
    %93 = vmatpush1.msra.mxu0 0.0
    %94 = vmatprep.subr.mxu0 0.0
    %95 = vmatpush1.msra.mxu0 0.0
    %96 = vmatprep.subr.mxu0 0.0
    %97 = vmatpush1.msra.mxu0 0.0
    %98 = vmatprep.subr.mxu0 0.0
    %99 = vmatpush1.msra.mxu0 0.0
    %100 = vmatprep.subr.mxu0 0.0
    %101 = vmatpush1.msra.mxu0 0.0
    %102 = vmatprep.subr.mxu0 0.0
    %103 = vmatpush1.msra.mxu0 0.0
    %104 = vmatprep.subr.mxu0 0.0
    %105 = vmatpush1.msra.mxu0 0.0
    %106 = vmatprep.subr.mxu0 0.0
    %107 = vmatpush1.msra.mxu0 0.0
    %108 = vmatprep.subr.mxu0 0.0
    %109 = vmatpush1.msra.mxu0 %v70
    %110 = vmatprep.subr.mxu0 0.0
    %111 = vmatpush2.msra.mxu0 0.0
    %112 = vmatprep.subr.mxu0 0.0
    %113 = vmatpush2.msra.mxu0 0.0
    %114 = vmatprep.subr.mxu0 0.0
    %115 = vmatpush2.msra.mxu0 0.0
    %116 = vmatprep.subr.mxu0 0.0
    %117 = vmatpush2.msra.mxu0 0.0
    %118 = vmatprep.subr.mxu0 0.0
    %119 = vmatpush2.msra.mxu0 0.0
    %120 = vmatprep.subr.mxu0 0.0
    %121 = vmatpush2.msra.mxu0 0.0
    %122 = vmatprep.subr.mxu0 0.0
    %123 = vmatpush2.msra.mxu0 0.0
    %124 = vmatprep.subr.mxu0 0.0
    %125 = vmatpush2.msra.mxu0 0.0
    %126 = vmatprep.subr.mxu0 0.0
    %127 = vmatpush2.msra.mxu0 0.0
    %128 = vmatprep.subr.mxu0 0.0
    %129 = vmatpush2.msra.mxu0 0.0
    %130 = vmatprep.subr.mxu0 0.0
    %131 = vmatpush2.msra.mxu0 0.0
    %132 = vmatprep.subr.mxu0 0.0
    %133 = vmatpush2.msra.mxu0 0.0
    %134 = vmatprep.subr.mxu0 0.0
    %135 = vmatpush2.msra.mxu0 0.0
    %136 = vmatprep.subr.mxu0 0.0
    %137 = vmatpush2.msra.mxu0 0.0
    %138 = vmatprep.subr.mxu0 0.0
    %139 = vmatpush2.msra.mxu0 0.0
    %140 = vmatprep.subr.mxu0 0.0
    %141 = vmatpush2.msra.mxu0 0.0
    %142 = vmatprep.mubr.f32.mxu0 0.0
    %143 = vmatmul.mubr.f32.gmra.mxu0 %v73
    %v144 = vpop.f32.mrf.mxu0
    %v145 = vadd.f32 0.0, %v144
    %v146 = vpop.f32.mrf.mxu0
    %147 = vmatprep.mubr.f32.mxu0 0.0
    %148 = vmatmul.mubr.f32.gmra.mxu0 %v76
    %v149 = vpop.f32.mrf.mxu0
    %v150 = vadd.f32 0.0, %v149
    %v151 = vpop.f32.mrf.mxu0
    %152 = vdwg.mxu0
    %vm153 = vcmask 162816
    %v155 = vsel %vm153, %v63, 0
    %v158 = vsel %vm153, %v64, 0
    %vm160 = vcmask 1043456
    %v162 = vsel %vm160, %v67, 0
    %164 = vmatprep.subr.mxu0 0.0
    %165 = vmatpush1.msra.mxu0 0.0
    %166 = vmatprep.subr.mxu0 0.0
    %167 = vmatpush1.msra.mxu0 0.0
    %168 = vmatprep.subr.mxu0 0.0
    %169 = vmatpush1.msra.mxu0 0.0
    %170 = vmatprep.subr.mxu0 0.0
    %171 = vmatpush1.msra.mxu0 0.0
    %172 = vmatprep.subr.mxu0 0.0
    %173 = vmatpush1.msra.mxu0 0.0
    %174 = vmatprep.subr.mxu0 0.0
    %175 = vmatpush1.msra.mxu0 0.0
    %176 = vmatprep.subr.mxu0 0.0
    %177 = vmatpush1.msra.mxu0 0.0
    %178 = vmatprep.subr.mxu0 0.0
    %179 = vmatpush1.msra.mxu0 0.0
    %180 = vmatprep.subr.mxu0 0.0
    %181 = vmatpush1.msra.mxu0 0.0
    %182 = vmatprep.subr.mxu0 0.0
    %183 = vmatpush1.msra.mxu0 0.0
    %184 = vmatprep.subr.mxu0 0.0
    %185 = vmatpush1.msra.mxu0 0.0
    %186 = vmatprep.subr.mxu0 0.0
    %187 = vmatpush1.msra.mxu0 0.0
    %188 = vmatprep.subr.mxu0 0.0
    %189 = vmatpush1.msra.mxu0 0.0
    %190 = vmatprep.subr.mxu0 0.0
    %191 = vmatpush1.msra.mxu0 %v162
    %192 = vmatprep.subr.mxu0 0.0
    %193 = vmatpush1.msra.mxu0 %v66
    %194 = vmatprep.subr.mxu0 0.0
    %195 = vmatpush1.msra.mxu0 %v65
    %196 = vmatprep.subr.mxu0 0.0
    %197 = vmatpush2.msra.mxu0 0.0
    %198 = vmatprep.subr.mxu0 0.0
    %199 = vmatpush2.msra.mxu0 0.0
    %200 = vmatprep.subr.mxu0 0.0
    %201 = vmatpush2.msra.mxu0 0.0
    %202 = vmatprep.subr.mxu0 0.0
    %203 = vmatpush2.msra.mxu0 0.0
    %204 = vmatprep.subr.mxu0 0.0
    %205 = vmatpush2.msra.mxu0 0.0
    %206 = vmatprep.subr.mxu0 0.0
    %207 = vmatpush2.msra.mxu0 0.0
    %208 = vmatprep.subr.mxu0 0.0
    %209 = vmatpush2.msra.mxu0 0.0
    %210 = vmatprep.subr.mxu0 0.0
    %211 = vmatpush2.msra.mxu0 0.0
    %212 = vmatprep.subr.mxu0 0.0
    %213 = vmatpush2.msra.mxu0 0.0
    %214 = vmatprep.subr.mxu0 0.0
    %215 = vmatpush2.msra.mxu0 0.0
    %216 = vmatprep.subr.mxu0 0.0
    %217 = vmatpush2.msra.mxu0 0.0
    %218 = vmatprep.subr.mxu0 0.0
    %219 = vmatpush2.msra.mxu0 0.0
    %220 = vmatprep.subr.mxu0 0.0
    %221 = vmatpush2.msra.mxu0 0.0
    %222 = vmatprep.subr.mxu0 0.0
    %223 = vmatpush2.msra.mxu0 0.0
    %224 = vmatprep.subr.mxu0 0.0
    %225 = vmatpush2.msra.mxu0 0.0
    %226 = vmatprep.subr.mxu0 0.0
    %227 = vmatpush2.msra.mxu0 0.0
    %228 = vmatprep.mubr.f32.mxu0 0.0
    %229 = vmatmul.mubr.f32.gmra.mxu0 %v155
    %v230 = vpop.f32.mrf.mxu0
    %v231 = vadd.f32 %v145, %v230
    %v232 = vpop.f32.mrf.mxu0
    %233 = vmatprep.mubr.f32.mxu0 0.0
    %234 = vmatmul.mubr.f32.gmra.mxu0 %v158
    %v235 = vpop.f32.mrf.mxu0
    %v236 = vadd.f32 %v150, %v235
    %v237 = vpop.f32.mrf.mxu0
    %238 = vdwg.mxu0
    %v239 = vld [vmem:[#allocation3 + $0x20] sm:$0x1]
    %v240 = vlaneseq
    %v241 = vshrl.u32 %v240, 7
    %v242 = vsub.s32 0, %v241
    %v243 = vrot.slane %v239, %v242
    %v244 = vadd.f32 %v231, %v243
    %v245 = vadd.f32 %v236, %v243
    %v246 = vld [vmem:[#allocation3 + $0x21] sm:$0x1]
    %v247 = vlaneseq
    %v248 = vshrl.u32 %v247, 7
    %v249 = vsub.s32 0, %v248
    %v250 = vrot.slane %v246, %v249
    %v251 = vld [vmem:[#allocation3 + $0x22] sm:$0x1]
    %v252 = vlaneseq
    %v253 = vshrl.u32 %v252, 7
    %v254 = vsub.s32 0, %v253
    %v255 = vrot.slane %v251, %v254
    %v256 = vld [vmem:[#allocation5] sm:$0xff]
    %v257 = vld [vmem:[#allocation5 + $0x8] sm:$0xff]
    %v258 = vld [vmem:[#allocation5 + $0x10] sm:$0xff]
    %v259 = vld [vmem:[#allocation5 + $0x18] sm:$0xff]
    %v260 = vld [vmem:[#allocation5 + $0x20] sm:$0xff]
    %v261 = vld [vmem:[#allocation5 + $0x28] sm:$0xff]
    %v262 = vld [vmem:[#allocation5 + $0x30] sm:$0xff]
    %v263 = vld [vmem:[#allocation5 + $0x38] sm:$0xff]
    %v264 = vld [vmem:[%s2] sm:$0x3]
    %v265 = vld [vmem:[%s2 + $0x2] sm:$0x3]
    %267 = vrot.lane.b32.xlu0 %v265, 32
    %v268 = vpop.permute.xlu0 %267
    %vm270 = vcmask 261120
    %v271 = vsel %vm270, %v264, %v268
    %v272 = vpack.c.bf16 %v271, %v271
    %v281 = vunpack.c.l.b16 %v256
    %v282 = vunpack.c.h.b16 %v256
    %v283 = vunpack.c.l.b16 %v257
    %v284 = vunpack.c.h.b16 %v257
    %v285 = vunpack.c.l.b16 %v258
    %v286 = vunpack.c.h.b16 %v258
    %v287 = vunpack.c.l.b16 %v259
    %v288 = vunpack.c.h.b16 %v259
    %v289 = vunpack.c.l.b16 %v260
    %v290 = vunpack.c.h.b16 %v260
    %v291 = vunpack.c.l.b16 %v261
    %v292 = vunpack.c.h.b16 %v261
    %v293 = vunpack.c.l.b16 %v262
    %v294 = vunpack.c.h.b16 %v262
    %v295 = vunpack.c.l.b16 %v263
    %v296 = vunpack.c.h.b16 %v263
    %v297 = vpack.c.b16 %v283, %v281
    %v298 = vpack.c.b16 %v284, %v282
    %v299 = vpack.c.b16 %v287, %v285
    %v300 = vpack.c.b16 %v288, %v286
    %v301 = vpack.c.b16 %v291, %v289
    %v302 = vpack.c.b16 %v292, %v290
    %v303 = vpack.c.b16 %v295, %v293
    %v304 = vpack.c.b16 %v296, %v294
    %vm313 = vcmask 523264
    %v315 = vsel %vm313, %v272, 0
    %317 = vmatprep.subr.bf16.mxu0 0
    %318 = vmatpush1.bf16.msra.mxu0 0
    %319 = vmatprep.subr.bf16.mxu0 0
    %320 = vmatpush1.bf16.msra.mxu0 0
    %321 = vmatprep.subr.bf16.mxu0 0
    %322 = vmatpush1.bf16.msra.mxu0 0
    %323 = vmatprep.subr.bf16.mxu0 0
    %324 = vmatpush1.bf16.msra.mxu0 0
    %325 = vmatprep.subr.bf16.mxu0 %v304
    %326 = vmatpush1.bf16.msra.mxu0 %v303
    %327 = vmatprep.subr.bf16.mxu0 %v302
    %328 = vmatpush1.bf16.msra.mxu0 %v301
    %329 = vmatprep.subr.bf16.mxu0 %v300
    %330 = vmatpush1.bf16.msra.mxu0 %v299
    %331 = vmatprep.subr.bf16.mxu0 %v298
    %332 = vmatpush1.bf16.msra.mxu0 %v297
    %333 = vmatprep.subr.bf16.mxu0 0
    %334 = vmatpush2.bf16.msra.mxu0 0
    %335 = vmatprep.subr.bf16.mxu0 0
    %336 = vmatpush2.bf16.msra.mxu0 0
    %337 = vmatprep.subr.bf16.mxu0 0
    %338 = vmatpush2.bf16.msra.mxu0 0
    %339 = vmatprep.subr.bf16.mxu0 0
    %340 = vmatpush2.bf16.msra.mxu0 0
    %341 = vmatprep.subr.bf16.mxu0 0
    %342 = vmatpush2.bf16.msra.mxu0 0
    %343 = vmatprep.subr.bf16.mxu0 0
    %344 = vmatpush2.bf16.msra.mxu0 0
    %345 = vmatprep.subr.bf16.mxu0 0
    %346 = vmatpush2.bf16.msra.mxu0 0
    %347 = vmatprep.subr.bf16.mxu0 0
    %348 = vmatpush2.bf16.msra.mxu0 0
    %349 = vmatprep.mubr.bf16.mxu0 0
    %350 = vmatmul.mubr.bf16.gmra.mxu0 %v315
    %v351 = vpop.f32.mrf.mxu0
    %v352 = vadd.f32 0.0, %v351
    %v353 = vpop.f32.mrf.mxu0
    %v354 = vpop.f32.mrf.mxu0
    %v355 = vpop.f32.mrf.mxu0
    %356 = vdwg.mxu0
    %v357 = vadd.f32 %v244, %v352
    %v358 = vxor.u32 %v357, 2147483648
    %v359 = vmul.f32 %v358, 1.442695
    %v360 = vpow.pop %v359
    %v361 = vadd.f32 %v360, 1.0
    %v362 = vrcp.pop %v361
    %v363 = vmul.f32 1.0, %v362
    %365 = vrot.lane.b32.xlu0 %v250, 64
    %v366 = vpop.permute.xlu0 %365
    %v368 = vadd.f32 %v352, %v366
    %370 = vrot.lane.b32.xlu0 %v368, 64
    %v371 = vpop.permute.xlu0 %370
    %v373 = vmul.f32 %v363, %v371
    %375 = vrot.lane.b32.xlu0 %v373, 64
    %v376 = vpop.permute.xlu0 %375
    %v378 = vadd.f32 %v244, %v376
    %v379 = vtanh.pop %v378
    %v380 = vsub.f32 1.0, %v363
    %382 = vrot.lane.b32.xlu0 %v379, 96
    %v383 = vpop.permute.xlu0 %382
    %v385 = vmul.f32 %v380, %v383
    %387 = vrot.lane.b32.xlu0 %v264, 32
    %v388 = vpop.permute.xlu0 %387
    %v390 = vmul.f32 %v363, %v388
    %v391 = vadd.f32 %v385, %v390
    %393 = vrot.lane.b32.xlu0 %v391, 96
    %v394 = vpop.permute.xlu0 %393
    %v396 = vsel %vm270, %v394, %v268
    %v397 = vpack.c.bf16 %v396, %v396
    %v399 = vsel %vm313, %v397, 0
    %401 = vmatprep.subr.bf16.mxu0 0
    %402 = vmatpush1.bf16.msra.mxu0 0
    %403 = vmatprep.subr.bf16.mxu0 0
    %404 = vmatpush1.bf16.msra.mxu0 0
    %405 = vmatprep.subr.bf16.mxu0 0
    %406 = vmatpush1.bf16.msra.mxu0 0
    %407 = vmatprep.subr.bf16.mxu0 0
    %408 = vmatpush1.bf16.msra.mxu0 0
    %409 = vmatprep.subr.bf16.mxu0 %v304
    %410 = vmatpush1.bf16.msra.mxu0 %v303
    %411 = vmatprep.subr.bf16.mxu0 %v302
    %412 = vmatpush1.bf16.msra.mxu0 %v301
    %413 = vmatprep.subr.bf16.mxu0 %v300
    %414 = vmatpush1.bf16.msra.mxu0 %v299
    %415 = vmatprep.subr.bf16.mxu0 %v298
    %416 = vmatpush1.bf16.msra.mxu0 %v297
    %417 = vmatprep.subr.bf16.mxu0 0
    %418 = vmatpush2.bf16.msra.mxu0 0
    %419 = vmatprep.subr.bf16.mxu0 0
    %420 = vmatpush2.bf16.msra.mxu0 0
    %421 = vmatprep.subr.bf16.mxu0 0
    %422 = vmatpush2.bf16.msra.mxu0 0
    %423 = vmatprep.subr.bf16.mxu0 0
    %424 = vmatpush2.bf16.msra.mxu0 0
    %425 = vmatprep.subr.bf16.mxu0 0
    %426 = vmatpush2.bf16.msra.mxu0 0
    %427 = vmatprep.subr.bf16.mxu0 0
    %428 = vmatpush2.bf16.msra.mxu0 0
    %429 = vmatprep.subr.bf16.mxu0 0
    %430 = vmatpush2.bf16.msra.mxu0 0
    %431 = vmatprep.subr.bf16.mxu0 0
    %432 = vmatpush2.bf16.msra.mxu0 0
    %433 = vmatprep.mubr.bf16.mxu0 0
    %434 = vmatmul.mubr.bf16.gmra.mxu0 %v399
    %v435 = vpop.f32.mrf.mxu0
    %v436 = vadd.f32 0.0, %v435
    %v437 = vpop.f32.mrf.mxu0
    %v438 = vadd.f32 0.0, %v437
    %v439 = vpop.f32.mrf.mxu0
    %v440 = vpop.f32.mrf.mxu0
    %441 = vdwg.mxu0
    %443 = vrot.lane.b32.xlu0 %v255, 96
    %v444 = vpop.permute.xlu0 %443
    %v446 = vadd.f32 %v436, %v444
    %v447 = vadd.f32 %v438, %v444
    %v448 = vxor.u32 %v446, 2147483648
    %v449 = vxor.u32 %v447, 2147483648
    %v450 = vmul.f32 %v448, 1.442695
    %v451 = vpow.pop %v450
    %v452 = vmul.f32 %v449, 1.442695
    %v453 = vpow.pop %v452
    %v454 = vadd.f32 %v451, 1.0
    %v455 = vadd.f32 %v453, 1.0
    %v456 = vrcp.pop %v454
    %v457 = vmul.f32 1.0, %v456
    %v458 = vrcp.pop %v455
    %v459 = vmul.f32 1.0, %v458
    %461 = vrot.lane.b32.xlu0 %v447, 32
    %v462 = vpop.permute.xlu0 %461
    %v464 = vmul.f32 %v457, %v462
    %466 = vrot.lane.b32.xlu0 %v464, 64
    %v467 = vpop.permute.xlu0 %466
    %v469 = vadd.f32 %v447, %v467
    %v470 = vtanh.pop %v469
    %v471 = vsub.f32 1.0, %v459
    %473 = vrot.lane.b32.xlu0 %v470, 96
    %v474 = vpop.permute.xlu0 %473
    %v476 = vmul.f32 %v471, %v474
    %v477 = vmul.f32 %v459, %v265
    %v478 = vadd.f32 %v476, %v477
    %vm479 = vcmask 254976
    %480 = vst.msk [vmem:[#allocation2] sm:$0x3] %vm479, %v478
    %v482 = vrot.slane %v436, 6
    %v484 = vadd.f32 %v244, %v482
    %v485 = vxor.u32 %v484, 2147483648
    %v486 = vmul.f32 %v485, 1.442695
    %v487 = vpow.pop %v486
    %v488 = vadd.f32 %v487, 1.0
    %v489 = vrcp.pop %v488
    %v490 = vmul.f32 1.0, %v489
    %v491 = vadd.f32 %v436, %v366
    %v493 = vrot.slane %v491, 6
    %494 = vrot.lane.b32.xlu0 %v493, 64
    %v495 = vpop.permute.xlu0 %494
    %v497 = vmul.f32 %v490, %v495
    %499 = vrot.lane.b32.xlu0 %v497, 64
    %v500 = vpop.permute.xlu0 %499
    %v502 = vadd.f32 %v244, %v500
    %v503 = vtanh.pop %v502
    %v504 = vsub.f32 1.0, %v490
    %506 = vrot.lane.b32.xlu0 %v503, 96
    %v507 = vpop.permute.xlu0 %506
    %v509 = vmul.f32 %v504, %v507
    %v510 = vrot.slane %v391, 6
    %v512 = vmul.f32 %v490, %v510
    %v513 = vadd.f32 %v509, %v512
    %515 = vrot.lane.b32.xlu0 %v513, 96
    %v516 = vpop.permute.xlu0 %515
    %v519 = vrot.slane %v478, 6
    %520 = vrot.lane.b32.xlu0 %v519, 32
    %v521 = vpop.permute.xlu0 %520
    %v523 = vsel %vm270, %v516, %v521
    %v524 = vpack.c.bf16 %v523, %v523
    %v526 = vrot.slane %v524, 1
    %v528 = vsel %vm313, %v526, 0
    %530 = vmatprep.subr.bf16.mxu0 0
    %531 = vmatpush1.bf16.msra.mxu0 0
    %532 = vmatprep.subr.bf16.mxu0 0
    %533 = vmatpush1.bf16.msra.mxu0 0
    %534 = vmatprep.subr.bf16.mxu0 0
    %535 = vmatpush1.bf16.msra.mxu0 0
    %536 = vmatprep.subr.bf16.mxu0 0
    %537 = vmatpush1.bf16.msra.mxu0 0
    %538 = vmatprep.subr.bf16.mxu0 %v304
    %539 = vmatpush1.bf16.msra.mxu0 %v303
    %540 = vmatprep.subr.bf16.mxu0 %v302
    %541 = vmatpush1.bf16.msra.mxu0 %v301
    %542 = vmatprep.subr.bf16.mxu0 %v300
    %543 = vmatpush1.bf16.msra.mxu0 %v299
    %544 = vmatprep.subr.bf16.mxu0 %v298
    %545 = vmatpush1.bf16.msra.mxu0 %v297
    %546 = vmatprep.subr.bf16.mxu0 0
    %547 = vmatpush2.bf16.msra.mxu0 0
    %548 = vmatprep.subr.bf16.mxu0 0
    %549 = vmatpush2.bf16.msra.mxu0 0
    %550 = vmatprep.subr.bf16.mxu0 0
    %551 = vmatpush2.bf16.msra.mxu0 0
    %552 = vmatprep.subr.bf16.mxu0 0
    %553 = vmatpush2.bf16.msra.mxu0 0
    %554 = vmatprep.subr.bf16.mxu0 0
    %555 = vmatpush2.bf16.msra.mxu0 0
    %556 = vmatprep.subr.bf16.mxu0 0
    %557 = vmatpush2.bf16.msra.mxu0 0
    %558 = vmatprep.subr.bf16.mxu0 0
    %559 = vmatpush2.bf16.msra.mxu0 0
    %560 = vmatprep.subr.bf16.mxu0 0
    %561 = vmatpush2.bf16.msra.mxu0 0
    %562 = vmatprep.mubr.bf16.mxu0 0
    %563 = vmatmul.mubr.bf16.gmra.mxu0 %v528
    %v564 = vpop.f32.mrf.mxu0
    %v565 = vadd.f32 0.0, %v564
    %v566 = vpop.f32.mrf.mxu0
    %v567 = vadd.f32 0.0, %v566
    %v568 = vpop.f32.mrf.mxu0
    %v569 = vpop.f32.mrf.mxu0
    %570 = vdwg.mxu0
    %v571 = vadd.f32 %v565, %v444
    %v572 = vadd.f32 %v567, %v444
    %v573 = vxor.u32 %v571, 2147483648
    %v574 = vxor.u32 %v572, 2147483648
    %v575 = vmul.f32 %v573, 1.442695
    %v576 = vpow.pop %v575
    %v577 = vmul.f32 %v574, 1.442695
    %v578 = vpow.pop %v577
    %v579 = vadd.f32 %v576, 1.0
    %v580 = vadd.f32 %v578, 1.0
    %v581 = vrcp.pop %v579
    %v582 = vmul.f32 1.0, %v581
    %v583 = vrcp.pop %v580
    %v584 = vmul.f32 1.0, %v583
    %586 = vrot.lane.b32.xlu0 %v572, 32
    %v587 = vpop.permute.xlu0 %586
    %v589 = vmul.f32 %v582, %v587
    %591 = vrot.lane.b32.xlu0 %v589, 64
    %v592 = vpop.permute.xlu0 %591
    %v594 = vadd.f32 %v572, %v592
    %v595 = vtanh.pop %v594
    %v596 = vsub.f32 1.0, %v584
    %598 = vrot.lane.b32.xlu0 %v595, 96
    %v599 = vpop.permute.xlu0 %598
    %v601 = vmul.f32 %v596, %v599
    %v602 = vmul.f32 %v584, %v478
    %v603 = vadd.f32 %v601, %v602
    %604 = vst.msk [vmem:[#allocation2 + $0x2] sm:$0x3] %vm479, %v603
    %v606 = vrot.slane %v565, 4
    %v608 = vadd.f32 %v244, %v606
    %v609 = vxor.u32 %v608, 2147483648
    %v610 = vmul.f32 %v609, 1.442695
    %v611 = vpow.pop %v610
    %v612 = vadd.f32 %v611, 1.0
    %v613 = vrcp.pop %v612
    %v614 = vmul.f32 1.0, %v613
    %v615 = vadd.f32 %v565, %v366
    %v617 = vrot.slane %v615, 4
    %618 = vrot.lane.b32.xlu0 %v617, 64
    %v619 = vpop.permute.xlu0 %618
    %v621 = vmul.f32 %v614, %v619
    %623 = vrot.lane.b32.xlu0 %v621, 64
    %v624 = vpop.permute.xlu0 %623
    %v626 = vadd.f32 %v244, %v624
    %v627 = vtanh.pop %v626
    %v628 = vsub.f32 1.0, %v614
    %630 = vrot.lane.b32.xlu0 %v627, 96
    %v631 = vpop.permute.xlu0 %630
    %v633 = vmul.f32 %v628, %v631
    %v634 = vrot.slane %v513, 6
    %v636 = vmul.f32 %v614, %v634
    %v637 = vadd.f32 %v633, %v636
    %639 = vrot.lane.b32.xlu0 %v637, 96
    %v640 = vpop.permute.xlu0 %639
    %v643 = vrot.slane %v603, 4
    %644 = vrot.lane.b32.xlu0 %v643, 32
    %v645 = vpop.permute.xlu0 %644
    %v647 = vsel %vm270, %v640, %v645
    %v648 = vpack.c.bf16 %v647, %v647
    %v650 = vrot.slane %v648, 2
    %v652 = vsel %vm313, %v650, 0
    %654 = vmatprep.subr.bf16.mxu0 0
    %655 = vmatpush1.bf16.msra.mxu0 0
    %656 = vmatprep.subr.bf16.mxu0 0
    %657 = vmatpush1.bf16.msra.mxu0 0
    %658 = vmatprep.subr.bf16.mxu0 0
    %659 = vmatpush1.bf16.msra.mxu0 0
    %660 = vmatprep.subr.bf16.mxu0 0
    %661 = vmatpush1.bf16.msra.mxu0 0
    %662 = vmatprep.subr.bf16.mxu0 %v304
    %663 = vmatpush1.bf16.msra.mxu0 %v303
    %664 = vmatprep.subr.bf16.mxu0 %v302
    %665 = vmatpush1.bf16.msra.mxu0 %v301
    %666 = vmatprep.subr.bf16.mxu0 %v300
    %667 = vmatpush1.bf16.msra.mxu0 %v299
    %668 = vmatprep.subr.bf16.mxu0 %v298
    %669 = vmatpush1.bf16.msra.mxu0 %v297
    %670 = vmatprep.subr.bf16.mxu0 0
    %671 = vmatpush2.bf16.msra.mxu0 0
    %672 = vmatprep.subr.bf16.mxu0 0
    %673 = vmatpush2.bf16.msra.mxu0 0
    %674 = vmatprep.subr.bf16.mxu0 0
    %675 = vmatpush2.bf16.msra.mxu0 0
    %676 = vmatprep.subr.bf16.mxu0 0
    %677 = vmatpush2.bf16.msra.mxu0 0
    %678 = vmatprep.subr.bf16.mxu0 0
    %679 = vmatpush2.bf16.msra.mxu0 0
    %680 = vmatprep.subr.bf16.mxu0 0
    %681 = vmatpush2.bf16.msra.mxu0 0
    %682 = vmatprep.subr.bf16.mxu0 0
    %683 = vmatpush2.bf16.msra.mxu0 0
    %684 = vmatprep.subr.bf16.mxu0 0
    %685 = vmatpush2.bf16.msra.mxu0 0
    %686 = vmatprep.mubr.bf16.mxu0 0
    %687 = vmatmul.mubr.bf16.gmra.mxu0 %v652
    %v688 = vpop.f32.mrf.mxu0
    %v689 = vadd.f32 0.0, %v688
    %v690 = vpop.f32.mrf.mxu0
    %v691 = vadd.f32 0.0, %v690
    %v692 = vpop.f32.mrf.mxu0
    %v693 = vpop.f32.mrf.mxu0
    %694 = vdwg.mxu0
    %v695 = vadd.f32 %v689, %v444
    %v696 = vadd.f32 %v691, %v444
    %v697 = vxor.u32 %v695, 2147483648
    %v698 = vxor.u32 %v696, 2147483648
    %v699 = vmul.f32 %v697, 1.442695
    %v700 = vpow.pop %v699
    %v701 = vmul.f32 %v698, 1.442695
    %v702 = vpow.pop %v701
    %v703 = vadd.f32 %v700, 1.0
    %v704 = vadd.f32 %v702, 1.0
    %v705 = vrcp.pop %v703
    %v706 = vmul.f32 1.0, %v705
    %v707 = vrcp.pop %v704
    %v708 = vmul.f32 1.0, %v707
    %710 = vrot.lane.b32.xlu0 %v696, 32
    %v711 = vpop.permute.xlu0 %710
    %v713 = vmul.f32 %v706, %v711
    %715 = vrot.lane.b32.xlu0 %v713, 64
    %v716 = vpop.permute.xlu0 %715
    %v718 = vadd.f32 %v696, %v716
    %v719 = vtanh.pop %v718
    %v720 = vsub.f32 1.0, %v708
    %722 = vrot.lane.b32.xlu0 %v719, 96
    %v723 = vpop.permute.xlu0 %722
    %v725 = vmul.f32 %v720, %v723
    %v726 = vmul.f32 %v708, %v603
    %v727 = vadd.f32 %v725, %v726
    %728 = vst.msk [vmem:[#allocation2 + $0x4] sm:$0x3] %vm479, %v727
    %v730 = vrot.slane %v689, 2
    %v732 = vadd.f32 %v244, %v730
    %v733 = vxor.u32 %v732, 2147483648
    %v734 = vmul.f32 %v733, 1.442695
    %v735 = vpow.pop %v734
    %v736 = vadd.f32 %v735, 1.0
    %v737 = vrcp.pop %v736
    %v738 = vmul.f32 1.0, %v737
    %v739 = vadd.f32 %v689, %v366
    %v741 = vrot.slane %v739, 2
    %742 = vrot.lane.b32.xlu0 %v741, 64
    %v743 = vpop.permute.xlu0 %742
    %v745 = vmul.f32 %v738, %v743
    %747 = vrot.lane.b32.xlu0 %v745, 64
    %v748 = vpop.permute.xlu0 %747
    %v750 = vadd.f32 %v244, %v748
    %v751 = vtanh.pop %v750
    %v752 = vsub.f32 1.0, %v738
    %754 = vrot.lane.b32.xlu0 %v751, 96
    %v755 = vpop.permute.xlu0 %754
    %v757 = vmul.f32 %v752, %v755
    %v758 = vrot.slane %v637, 6
    %v760 = vmul.f32 %v738, %v758
    %v761 = vadd.f32 %v757, %v760
    %763 = vrot.lane.b32.xlu0 %v761, 96
    %v764 = vpop.permute.xlu0 %763
    %v767 = vrot.slane %v727, 2
    %768 = vrot.lane.b32.xlu0 %v767, 32
    %v769 = vpop.permute.xlu0 %768
    %v771 = vsel %vm270, %v764, %v769
    %v772 = vpack.c.bf16 %v771, %v771
    %v774 = vrot.slane %v772, 3
    %v776 = vsel %vm313, %v774, 0
    %778 = vmatprep.subr.bf16.mxu0 0
    %779 = vmatpush1.bf16.msra.mxu0 0
    %780 = vmatprep.subr.bf16.mxu0 0
    %781 = vmatpush1.bf16.msra.mxu0 0
    %782 = vmatprep.subr.bf16.mxu0 0
    %783 = vmatpush1.bf16.msra.mxu0 0
    %784 = vmatprep.subr.bf16.mxu0 0
    %785 = vmatpush1.bf16.msra.mxu0 0
    %786 = vmatprep.subr.bf16.mxu0 %v304
    %787 = vmatpush1.bf16.msra.mxu0 %v303
    %788 = vmatprep.subr.bf16.mxu0 %v302
    %789 = vmatpush1.bf16.msra.mxu0 %v301
    %790 = vmatprep.subr.bf16.mxu0 %v300
    %791 = vmatpush1.bf16.msra.mxu0 %v299
    %792 = vmatprep.subr.bf16.mxu0 %v298
    %793 = vmatpush1.bf16.msra.mxu0 %v297
    %794 = vmatprep.subr.bf16.mxu0 0
    %795 = vmatpush2.bf16.msra.mxu0 0
    %796 = vmatprep.subr.bf16.mxu0 0
    %797 = vmatpush2.bf16.msra.mxu0 0
    %798 = vmatprep.subr.bf16.mxu0 0
    %799 = vmatpush2.bf16.msra.mxu0 0
    %800 = vmatprep.subr.bf16.mxu0 0
    %801 = vmatpush2.bf16.msra.mxu0 0
    %802 = vmatprep.subr.bf16.mxu0 0
    %803 = vmatpush2.bf16.msra.mxu0 0
    %804 = vmatprep.subr.bf16.mxu0 0
    %805 = vmatpush2.bf16.msra.mxu0 0
    %806 = vmatprep.subr.bf16.mxu0 0
    %807 = vmatpush2.bf16.msra.mxu0 0
    %808 = vmatprep.subr.bf16.mxu0 0
    %809 = vmatpush2.bf16.msra.mxu0 0
    %810 = vmatprep.mubr.bf16.mxu0 0
    %811 = vmatmul.mubr.bf16.gmra.mxu0 %v776
    %v812 = vpop.f32.mrf.mxu0
    %v813 = vadd.f32 0.0, %v812
    %v814 = vpop.f32.mrf.mxu0
    %v815 = vadd.f32 0.0, %v814
    %v816 = vpop.f32.mrf.mxu0
    %v817 = vpop.f32.mrf.mxu0
    %818 = vdwg.mxu0
    %v819 = vadd.f32 %v813, %v444
    %v820 = vadd.f32 %v815, %v444
    %v821 = vxor.u32 %v819, 2147483648
    %v822 = vxor.u32 %v820, 2147483648
    %v823 = vmul.f32 %v821, 1.442695
    %v824 = vpow.pop %v823
    %v825 = vmul.f32 %v822, 1.442695
    %v826 = vpow.pop %v825
    %v827 = vadd.f32 %v824, 1.0
    %v828 = vadd.f32 %v826, 1.0
    %v829 = vrcp.pop %v827
    %v830 = vmul.f32 1.0, %v829
    %v831 = vrcp.pop %v828
    %v832 = vmul.f32 1.0, %v831
    %834 = vrot.lane.b32.xlu0 %v820, 32
    %v835 = vpop.permute.xlu0 %834
    %v837 = vmul.f32 %v830, %v835
    %839 = vrot.lane.b32.xlu0 %v837, 64
    %v840 = vpop.permute.xlu0 %839
    %v842 = vadd.f32 %v820, %v840
    %v843 = vtanh.pop %v842
    %v844 = vsub.f32 1.0, %v832
    %846 = vrot.lane.b32.xlu0 %v843, 96
    %v847 = vpop.permute.xlu0 %846
    %v849 = vmul.f32 %v844, %v847
    %v850 = vmul.f32 %v832, %v727
    %v851 = vadd.f32 %v849, %v850
    %852 = vst.msk [vmem:[#allocation2 + $0x6] sm:$0x3] %vm479, %v851
    %v853 = vadd.f32 %v245, %v813
    %v854 = vxor.u32 %v853, 2147483648
    %v855 = vmul.f32 %v854, 1.442695
    %v856 = vpow.pop %v855
    %v857 = vadd.f32 %v856, 1.0
    %v858 = vrcp.pop %v857
    %v859 = vmul.f32 1.0, %v858
    %v860 = vadd.f32 %v813, %v366
    %862 = vrot.lane.b32.xlu0 %v860, 64
    %v863 = vpop.permute.xlu0 %862
    %v865 = vmul.f32 %v859, %v863
    %867 = vrot.lane.b32.xlu0 %v865, 64
    %v868 = vpop.permute.xlu0 %867
    %v870 = vadd.f32 %v245, %v868
    %v871 = vtanh.pop %v870
    %v872 = vsub.f32 1.0, %v859
    %874 = vrot.lane.b32.xlu0 %v871, 96
    %v875 = vpop.permute.xlu0 %874
    %v877 = vmul.f32 %v872, %v875
    %v878 = vrot.slane %v761, 6
    %v880 = vmul.f32 %v859, %v878
    %v881 = vadd.f32 %v877, %v880
    %883 = vrot.lane.b32.xlu0 %v881, 96
    %v884 = vpop.permute.xlu0 %883
    %887 = vrot.lane.b32.xlu0 %v851, 32
    %v888 = vpop.permute.xlu0 %887
    %v890 = vsel %vm270, %v884, %v888
    %v891 = vpack.c.bf16 %v890, %v890
    %v893 = vsel %vm313, %v891, 0
    %895 = vmatprep.subr.bf16.mxu0 0
    %896 = vmatpush1.bf16.msra.mxu0 0
    %897 = vmatprep.subr.bf16.mxu0 0
    %898 = vmatpush1.bf16.msra.mxu0 0
    %899 = vmatprep.subr.bf16.mxu0 0
    %900 = vmatpush1.bf16.msra.mxu0 0
    %901 = vmatprep.subr.bf16.mxu0 0
    %902 = vmatpush1.bf16.msra.mxu0 0
    %903 = vmatprep.subr.bf16.mxu0 %v304
    %904 = vmatpush1.bf16.msra.mxu0 %v303
    %905 = vmatprep.subr.bf16.mxu0 %v302
    %906 = vmatpush1.bf16.msra.mxu0 %v301
    %907 = vmatprep.subr.bf16.mxu0 %v300
    %908 = vmatpush1.bf16.msra.mxu0 %v299
    %909 = vmatprep.subr.bf16.mxu0 %v298
    %910 = vmatpush1.bf16.msra.mxu0 %v297
    %911 = vmatprep.subr.bf16.mxu0 0
    %912 = vmatpush2.bf16.msra.mxu0 0
    %913 = vmatprep.subr.bf16.mxu0 0
    %914 = vmatpush2.bf16.msra.mxu0 0
    %915 = vmatprep.subr.bf16.mxu0 0
    %916 = vmatpush2.bf16.msra.mxu0 0
    %917 = vmatprep.subr.bf16.mxu0 0
    %918 = vmatpush2.bf16.msra.mxu0 0
    %919 = vmatprep.subr.bf16.mxu0 0
    %920 = vmatpush2.bf16.msra.mxu0 0
    %921 = vmatprep.subr.bf16.mxu0 0
    %922 = vmatpush2.bf16.msra.mxu0 0
    %923 = vmatprep.subr.bf16.mxu0 0
    %924 = vmatpush2.bf16.msra.mxu0 0
    %925 = vmatprep.subr.bf16.mxu0 0
    %926 = vmatpush2.bf16.msra.mxu0 0
    %927 = vmatprep.mubr.bf16.mxu0 0
    %928 = vmatmul.mubr.bf16.gmra.mxu0 %v893
    %v929 = vpop.f32.mrf.mxu0
    %v930 = vadd.f32 0.0, %v929
    %v931 = vpop.f32.mrf.mxu0
    %v932 = vadd.f32 0.0, %v931
    %v933 = vpop.f32.mrf.mxu0
    %v934 = vpop.f32.mrf.mxu0
    %935 = vdwg.mxu0
    %v936 = vadd.f32 %v930, %v444
    %v937 = vadd.f32 %v932, %v444
    %v938 = vxor.u32 %v936, 2147483648
    %v939 = vxor.u32 %v937, 2147483648
    %v940 = vmul.f32 %v938, 1.442695
    %v941 = vpow.pop %v940
    %v942 = vmul.f32 %v939, 1.442695
    %v943 = vpow.pop %v942
    %v944 = vadd.f32 %v941, 1.0
    %v945 = vadd.f32 %v943, 1.0
    %v946 = vrcp.pop %v944
    %v947 = vmul.f32 1.0, %v946
    %v948 = vrcp.pop %v945
    %v949 = vmul.f32 1.0, %v948
    %951 = vrot.lane.b32.xlu0 %v937, 32
    %v952 = vpop.permute.xlu0 %951
    %v954 = vmul.f32 %v947, %v952
    %956 = vrot.lane.b32.xlu0 %v954, 64
    %v957 = vpop.permute.xlu0 %956
    %v959 = vadd.f32 %v937, %v957
    %v960 = vtanh.pop %v959
    %v961 = vsub.f32 1.0, %v949
    %963 = vrot.lane.b32.xlu0 %v960, 96
    %v964 = vpop.permute.xlu0 %963
    %v966 = vmul.f32 %v961, %v964
    %v967 = vmul.f32 %v949, %v851
    %v968 = vadd.f32 %v966, %v967
    %969 = vst.msk [vmem:[#allocation2 + $0x8] sm:$0x3] %vm479, %v968
    %v971 = vrot.slane %v930, 6
    %v973 = vadd.f32 %v245, %v971
    %v974 = vxor.u32 %v973, 2147483648
    %v975 = vmul.f32 %v974, 1.442695
    %v976 = vpow.pop %v975
    %v977 = vadd.f32 %v976, 1.0
    %v978 = vrcp.pop %v977
    %v979 = vmul.f32 1.0, %v978
    %v980 = vadd.f32 %v930, %v366
    %v982 = vrot.slane %v980, 6
    %983 = vrot.lane.b32.xlu0 %v982, 64
    %v984 = vpop.permute.xlu0 %983
    %v986 = vmul.f32 %v979, %v984
    %988 = vrot.lane.b32.xlu0 %v986, 64
    %v989 = vpop.permute.xlu0 %988
    %v991 = vadd.f32 %v245, %v989
    %v992 = vtanh.pop %v991
    %v993 = vsub.f32 1.0, %v979
    %995 = vrot.lane.b32.xlu0 %v992, 96
    %v996 = vpop.permute.xlu0 %995
    %v998 = vmul.f32 %v993, %v996
    %v999 = vrot.slane %v881, 6
    %v1001 = vmul.f32 %v979, %v999
    %v1002 = vadd.f32 %v998, %v1001
    %1004 = vrot.lane.b32.xlu0 %v1002, 96
    %v1005 = vpop.permute.xlu0 %1004
    %v1008 = vrot.slane %v968, 6
    %1009 = vrot.lane.b32.xlu0 %v1008, 32
    %v1010 = vpop.permute.xlu0 %1009
    %v1012 = vsel %vm270, %v1005, %v1010
    %v1013 = vpack.c.bf16 %v1012, %v1012
    %v1015 = vrot.slane %v1013, 1
    %v1017 = vsel %vm313, %v1015, 0
    %1019 = vmatprep.subr.bf16.mxu0 0
    %1020 = vmatpush1.bf16.msra.mxu0 0
    %1021 = vmatprep.subr.bf16.mxu0 0
    %1022 = vmatpush1.bf16.msra.mxu0 0
    %1023 = vmatprep.subr.bf16.mxu0 0
    %1024 = vmatpush1.bf16.msra.mxu0 0
    %1025 = vmatprep.subr.bf16.mxu0 0
    %1026 = vmatpush1.bf16.msra.mxu0 0
    %1027 = vmatprep.subr.bf16.mxu0 %v304
    %1028 = vmatpush1.bf16.msra.mxu0 %v303
    %1029 = vmatprep.subr.bf16.mxu0 %v302
    %1030 = vmatpush1.bf16.msra.mxu0 %v301
    %1031 = vmatprep.subr.bf16.mxu0 %v300
    %1032 = vmatpush1.bf16.msra.mxu0 %v299
    %1033 = vmatprep.subr.bf16.mxu0 %v298
    %1034 = vmatpush1.bf16.msra.mxu0 %v297
    %1035 = vmatprep.subr.bf16.mxu0 0
    %1036 = vmatpush2.bf16.msra.mxu0 0
    %1037 = vmatprep.subr.bf16.mxu0 0
    %1038 = vmatpush2.bf16.msra.mxu0 0
    %1039 = vmatprep.subr.bf16.mxu0 0
    %1040 = vmatpush2.bf16.msra.mxu0 0
    %1041 = vmatprep.subr.bf16.mxu0 0
    %1042 = vmatpush2.bf16.msra.mxu0 0
    %1043 = vmatprep.subr.bf16.mxu0 0
    %1044 = vmatpush2.bf16.msra.mxu0 0
    %1045 = vmatprep.subr.bf16.mxu0 0
    %1046 = vmatpush2.bf16.msra.mxu0 0
    %1047 = vmatprep.subr.bf16.mxu0 0
    %1048 = vmatpush2.bf16.msra.mxu0 0
    %1049 = vmatprep.subr.bf16.mxu0 0
    %1050 = vmatpush2.bf16.msra.mxu0 0
    %1051 = vmatprep.mubr.bf16.mxu0 0
    %1052 = vmatmul.mubr.bf16.gmra.mxu0 %v1017
    %v1053 = vpop.f32.mrf.mxu0
    %v1054 = vadd.f32 0.0, %v1053
    %v1055 = vpop.f32.mrf.mxu0
    %v1056 = vadd.f32 0.0, %v1055
    %v1057 = vpop.f32.mrf.mxu0
    %v1058 = vpop.f32.mrf.mxu0
    %1059 = vdwg.mxu0
    %v1060 = vadd.f32 %v1054, %v444
    %v1061 = vadd.f32 %v1056, %v444
    %v1062 = vxor.u32 %v1060, 2147483648
    %v1063 = vxor.u32 %v1061, 2147483648
    %v1064 = vmul.f32 %v1062, 1.442695
    %v1065 = vpow.pop %v1064
    %v1066 = vmul.f32 %v1063, 1.442695
    %v1067 = vpow.pop %v1066
    %v1068 = vadd.f32 %v1065, 1.0
    %v1069 = vadd.f32 %v1067, 1.0
    %v1070 = vrcp.pop %v1068
    %v1071 = vmul.f32 1.0, %v1070
    %v1072 = vrcp.pop %v1069
    %v1073 = vmul.f32 1.0, %v1072
    %1075 = vrot.lane.b32.xlu0 %v1061, 32
    %v1076 = vpop.permute.xlu0 %1075
    %v1078 = vmul.f32 %v1071, %v1076
    %1080 = vrot.lane.b32.xlu0 %v1078, 64
    %v1081 = vpop.permute.xlu0 %1080
    %v1083 = vadd.f32 %v1061, %v1081
    %v1084 = vtanh.pop %v1083
    %v1085 = vsub.f32 1.0, %v1073
    %1087 = vrot.lane.b32.xlu0 %v1084, 96
    %v1088 = vpop.permute.xlu0 %1087
    %v1090 = vmul.f32 %v1085, %v1088
    %v1091 = vmul.f32 %v1073, %v968
    %v1092 = vadd.f32 %v1090, %v1091
    %1093 = vst.msk [vmem:[#allocation2 + $0xa] sm:$0x3] %vm479, %v1092
    %v1095 = vrot.slane %v1054, 4
    %v1097 = vadd.f32 %v245, %v1095
    %v1098 = vxor.u32 %v1097, 2147483648
    %v1099 = vmul.f32 %v1098, 1.442695
    %v1100 = vpow.pop %v1099
    %v1101 = vadd.f32 %v1100, 1.0
    %v1102 = vrcp.pop %v1101
    %v1103 = vmul.f32 1.0, %v1102
    %v1104 = vadd.f32 %v1054, %v366
    %v1106 = vrot.slane %v1104, 4
    %1107 = vrot.lane.b32.xlu0 %v1106, 64
    %v1108 = vpop.permute.xlu0 %1107
    %v1110 = vmul.f32 %v1103, %v1108
    %1112 = vrot.lane.b32.xlu0 %v1110, 64
    %v1113 = vpop.permute.xlu0 %1112
    %v1115 = vadd.f32 %v245, %v1113
    %v1116 = vtanh.pop %v1115
    %v1117 = vsub.f32 1.0, %v1103
    %1119 = vrot.lane.b32.xlu0 %v1116, 96
    %v1120 = vpop.permute.xlu0 %1119
    %v1122 = vmul.f32 %v1117, %v1120
    %v1123 = vrot.slane %v1002, 6
    %v1125 = vmul.f32 %v1103, %v1123
    %v1126 = vadd.f32 %v1122, %v1125
    %1128 = vrot.lane.b32.xlu0 %v1126, 96
    %v1129 = vpop.permute.xlu0 %1128
    %v1132 = vrot.slane %v1092, 4
    %1133 = vrot.lane.b32.xlu0 %v1132, 32
    %v1134 = vpop.permute.xlu0 %1133
    %v1136 = vsel %vm270, %v1129, %v1134
    %v1137 = vpack.c.bf16 %v1136, %v1136
    %v1139 = vrot.slane %v1137, 2
    %v1141 = vsel %vm313, %v1139, 0
    %1143 = vmatprep.subr.bf16.mxu0 0
    %1144 = vmatpush1.bf16.msra.mxu0 0
    %1145 = vmatprep.subr.bf16.mxu0 0
    %1146 = vmatpush1.bf16.msra.mxu0 0
    %1147 = vmatprep.subr.bf16.mxu0 0
    %1148 = vmatpush1.bf16.msra.mxu0 0
    %1149 = vmatprep.subr.bf16.mxu0 0
    %1150 = vmatpush1.bf16.msra.mxu0 0
    %1151 = vmatprep.subr.bf16.mxu0 %v304
    %1152 = vmatpush1.bf16.msra.mxu0 %v303
    %1153 = vmatprep.subr.bf16.mxu0 %v302
    %1154 = vmatpush1.bf16.msra.mxu0 %v301
    %1155 = vmatprep.subr.bf16.mxu0 %v300
    %1156 = vmatpush1.bf16.msra.mxu0 %v299
    %1157 = vmatprep.subr.bf16.mxu0 %v298
    %1158 = vmatpush1.bf16.msra.mxu0 %v297
    %1159 = vmatprep.subr.bf16.mxu0 0
    %1160 = vmatpush2.bf16.msra.mxu0 0
    %1161 = vmatprep.subr.bf16.mxu0 0
    %1162 = vmatpush2.bf16.msra.mxu0 0
    %1163 = vmatprep.subr.bf16.mxu0 0
    %1164 = vmatpush2.bf16.msra.mxu0 0
    %1165 = vmatprep.subr.bf16.mxu0 0
    %1166 = vmatpush2.bf16.msra.mxu0 0
    %1167 = vmatprep.subr.bf16.mxu0 0
    %1168 = vmatpush2.bf16.msra.mxu0 0
    %1169 = vmatprep.subr.bf16.mxu0 0
    %1170 = vmatpush2.bf16.msra.mxu0 0
    %1171 = vmatprep.subr.bf16.mxu0 0
    %1172 = vmatpush2.bf16.msra.mxu0 0
    %1173 = vmatprep.subr.bf16.mxu0 0
    %1174 = vmatpush2.bf16.msra.mxu0 0
    %1175 = vmatprep.mubr.bf16.mxu0 0
    %1176 = vmatmul.mubr.bf16.gmra.mxu0 %v1141
    %v1177 = vpop.f32.mrf.mxu0
    %v1178 = vadd.f32 0.0, %v1177
    %v1179 = vpop.f32.mrf.mxu0
    %v1180 = vadd.f32 0.0, %v1179
    %v1181 = vpop.f32.mrf.mxu0
    %v1182 = vpop.f32.mrf.mxu0
    %1183 = vdwg.mxu0
    %v1184 = vadd.f32 %v1178, %v444
    %v1185 = vadd.f32 %v1180, %v444
    %v1186 = vxor.u32 %v1184, 2147483648
    %v1187 = vxor.u32 %v1185, 2147483648
    %v1188 = vmul.f32 %v1186, 1.442695
    %v1189 = vpow.pop %v1188
    %v1190 = vmul.f32 %v1187, 1.442695
    %v1191 = vpow.pop %v1190
    %v1192 = vadd.f32 %v1189, 1.0
    %v1193 = vadd.f32 %v1191, 1.0
    %v1194 = vrcp.pop %v1192
    %v1195 = vmul.f32 1.0, %v1194
    %v1196 = vrcp.pop %v1193
    %v1197 = vmul.f32 1.0, %v1196
    %1199 = vrot.lane.b32.xlu0 %v1185, 32
    %v1200 = vpop.permute.xlu0 %1199
    %v1202 = vmul.f32 %v1195, %v1200
    %1204 = vrot.lane.b32.xlu0 %v1202, 64
    %v1205 = vpop.permute.xlu0 %1204
    %v1207 = vadd.f32 %v1185, %v1205
    %v1208 = vtanh.pop %v1207
    %v1209 = vsub.f32 1.0, %v1197
    %1211 = vrot.lane.b32.xlu0 %v1208, 96
    %v1212 = vpop.permute.xlu0 %1211
    %v1214 = vmul.f32 %v1209, %v1212
    %v1215 = vmul.f32 %v1197, %v1092
    %v1216 = vadd.f32 %v1214, %v1215
    %1217 = vst.msk [vmem:[#allocation2 + $0xc] sm:$0x3] %vm479, %v1216
    %v1219 = vrot.slane %v1178, 2
    %v1221 = vadd.f32 %v245, %v1219
    %v1222 = vxor.u32 %v1221, 2147483648
    %v1223 = vmul.f32 %v1222, 1.442695
    %v1224 = vpow.pop %v1223
    %v1225 = vadd.f32 %v1224, 1.0
    %v1226 = vrcp.pop %v1225
    %v1227 = vmul.f32 1.0, %v1226
    %v1228 = vadd.f32 %v1178, %v366
    %v1230 = vrot.slane %v1228, 2
    %1231 = vrot.lane.b32.xlu0 %v1230, 64
    %v1232 = vpop.permute.xlu0 %1231
    %v1234 = vmul.f32 %v1227, %v1232
    %1236 = vrot.lane.b32.xlu0 %v1234, 64
    %v1237 = vpop.permute.xlu0 %1236
    %v1239 = vadd.f32 %v245, %v1237
    %v1240 = vtanh.pop %v1239
    %v1241 = vsub.f32 1.0, %v1227
    %1243 = vrot.lane.b32.xlu0 %v1240, 96
    %v1244 = vpop.permute.xlu0 %1243
    %v1246 = vmul.f32 %v1241, %v1244
    %v1247 = vrot.slane %v1126, 6
    %v1249 = vmul.f32 %v1227, %v1247
    %v1250 = vadd.f32 %v1246, %v1249
    %1252 = vrot.lane.b32.xlu0 %v1250, 96
    %v1253 = vpop.permute.xlu0 %1252
    %v1256 = vrot.slane %v1216, 2
    %1257 = vrot.lane.b32.xlu0 %v1256, 32
    %v1258 = vpop.permute.xlu0 %1257
    %v1260 = vsel %vm270, %v1253, %v1258
    %v1261 = vpack.c.bf16 %v1260, %v1260
    %v1263 = vrot.slane %v1261, 3
    %v1265 = vsel %vm313, %v1263, 0
    %1267 = vmatprep.subr.bf16.mxu0 0
    %1268 = vmatpush1.bf16.msra.mxu0 0
    %1269 = vmatprep.subr.bf16.mxu0 0
    %1270 = vmatpush1.bf16.msra.mxu0 0
    %1271 = vmatprep.subr.bf16.mxu0 0
    %1272 = vmatpush1.bf16.msra.mxu0 0
    %1273 = vmatprep.subr.bf16.mxu0 0
    %1274 = vmatpush1.bf16.msra.mxu0 0
    %1275 = vmatprep.subr.bf16.mxu0 %v304
    %1276 = vmatpush1.bf16.msra.mxu0 %v303
    %1277 = vmatprep.subr.bf16.mxu0 %v302
    %1278 = vmatpush1.bf16.msra.mxu0 %v301
    %1279 = vmatprep.subr.bf16.mxu0 %v300
    %1280 = vmatpush1.bf16.msra.mxu0 %v299
    %1281 = vmatprep.subr.bf16.mxu0 %v298
    %1282 = vmatpush1.bf16.msra.mxu0 %v297
    %1283 = vmatprep.subr.bf16.mxu0 0
    %1284 = vmatpush2.bf16.msra.mxu0 0
    %1285 = vmatprep.subr.bf16.mxu0 0
    %1286 = vmatpush2.bf16.msra.mxu0 0
    %1287 = vmatprep.subr.bf16.mxu0 0
    %1288 = vmatpush2.bf16.msra.mxu0 0
    %1289 = vmatprep.subr.bf16.mxu0 0
    %1290 = vmatpush2.bf16.msra.mxu0 0
    %1291 = vmatprep.subr.bf16.mxu0 0
    %1292 = vmatpush2.bf16.msra.mxu0 0
    %1293 = vmatprep.subr.bf16.mxu0 0
    %1294 = vmatpush2.bf16.msra.mxu0 0
    %1295 = vmatprep.subr.bf16.mxu0 0
    %1296 = vmatpush2.bf16.msra.mxu0 0
    %1297 = vmatprep.subr.bf16.mxu0 0
    %1298 = vmatpush2.bf16.msra.mxu0 0
    %1299 = vmatprep.mubr.bf16.mxu0 0
    %1300 = vmatmul.mubr.bf16.gmra.mxu0 %v1265
    %v1301 = vpop.f32.mrf.mxu0
    %v1302 = vadd.f32 0.0, %v1301
    %v1303 = vpop.f32.mrf.mxu0
    %v1304 = vadd.f32 0.0, %v1303
    %v1305 = vpop.f32.mrf.mxu0
    %v1306 = vpop.f32.mrf.mxu0
    %1307 = vdwg.mxu0
    %v1308 = vadd.f32 %v1302, %v444
    %v1309 = vadd.f32 %v1304, %v444
    %v1310 = vxor.u32 %v1308, 2147483648
    %v1311 = vxor.u32 %v1309, 2147483648
    %v1312 = vmul.f32 %v1310, 1.442695
    %v1313 = vpow.pop %v1312
    %v1314 = vmul.f32 %v1311, 1.442695
    %v1315 = vpow.pop %v1314
    %v1316 = vadd.f32 %v1313, 1.0
    %v1317 = vadd.f32 %v1315, 1.0
    %v1318 = vrcp.pop %v1316
    %v1319 = vmul.f32 1.0, %v1318
    %v1320 = vrcp.pop %v1317
    %v1321 = vmul.f32 1.0, %v1320
    %1323 = vrot.lane.b32.xlu0 %v1309, 32
    %v1324 = vpop.permute.xlu0 %1323
    %v1326 = vmul.f32 %v1319, %v1324
    %1328 = vrot.lane.b32.xlu0 %v1326, 64
    %v1329 = vpop.permute.xlu0 %1328
    %v1331 = vadd.f32 %v1309, %v1329
    %v1332 = vtanh.pop %v1331
    %v1333 = vsub.f32 1.0, %v1321
    %1335 = vrot.lane.b32.xlu0 %v1332, 96
    %v1336 = vpop.permute.xlu0 %1335
    %v1338 = vmul.f32 %v1333, %v1336
    %v1339 = vmul.f32 %v1321, %v1216
    %v1340 = vadd.f32 %v1338, %v1339
    %1341 = vst.msk [vmem:[#allocation2 + $0xe] sm:$0x3] %vm479, %v1340
    %vm1342 = vcmask 261126
    %1343 = vst.msk [vmem:[%s5 + $0xa] sm:$0xc0] %vm1342, %v1253
    %1344 = vst.msk [vmem:[%s5 + $0x12] sm:$0x3] %vm479, %v1340
    %v1345 = vld [vmem:[#allocation2] sm:$0xff]
    %v1346 = vld [vmem:[#allocation2 + $0x8] sm:$0xff]
    %v1347 = vld [vmem:[#allocation3 + $0x28] sm:$0xff]
    %v1348 = vld [vmem:[#allocation3 + $0x30] sm:$0xff]
    %v1349 = vld [vmem:[#allocation3 + $0x38] sm:$0xff]
    %v1350 = vld [vmem:[#allocation3 + $0x40] sm:$0xff]
    %v1351 = vld [vmem:[#allocation3 + $0x48] sm:$0x1]
    %v1352 = vlaneseq
    %v1353 = vshrl.u32 %v1352, 7
    %v1354 = vsub.s32 0, %v1353
    %v1355 = vrot.slane %v1351, %v1354
    %v1357 = vsel %vm270, %v1345, 0
    %v1360 = vsel %vm270, %v1346, 0
    %1362 = vmatprep.subr.mxu0 0.0
    %1363 = vmatpush1.msra.mxu0 0.0
    %1364 = vmatprep.subr.mxu0 0.0
    %1365 = vmatpush1.msra.mxu0 0.0
    %1366 = vmatprep.subr.mxu0 0.0
    %1367 = vmatpush1.msra.mxu0 0.0
    %1368 = vmatprep.subr.mxu0 0.0
    %1369 = vmatpush1.msra.mxu0 0.0
    %1370 = vmatprep.subr.mxu0 0.0
    %1371 = vmatpush1.msra.mxu0 0.0
    %1372 = vmatprep.subr.mxu0 0.0
    %1373 = vmatpush1.msra.mxu0 0.0
    %1374 = vmatprep.subr.mxu0 0.0
    %1375 = vmatpush1.msra.mxu0 0.0
    %1376 = vmatprep.subr.mxu0 0.0
    %1377 = vmatpush1.msra.mxu0 0.0
    %1378 = vmatprep.subr.mxu0 0.0
    %1379 = vmatpush1.msra.mxu0 0.0
    %1380 = vmatprep.subr.mxu0 0.0
    %1381 = vmatpush1.msra.mxu0 0.0
    %1382 = vmatprep.subr.mxu0 0.0
    %1383 = vmatpush1.msra.mxu0 0.0
    %1384 = vmatprep.subr.mxu0 0.0
    %1385 = vmatpush1.msra.mxu0 0.0
    %1386 = vmatprep.subr.mxu0 0.0
    %1387 = vmatpush1.msra.mxu0 %v1350
    %1388 = vmatprep.subr.mxu0 0.0
    %1389 = vmatpush1.msra.mxu0 %v1349
    %1390 = vmatprep.subr.mxu0 0.0
    %1391 = vmatpush1.msra.mxu0 %v1348
    %1392 = vmatprep.subr.mxu0 0.0
    %1393 = vmatpush1.msra.mxu0 %v1347
    %1394 = vmatprep.subr.mxu0 0.0
    %1395 = vmatpush2.msra.mxu0 0.0
    %1396 = vmatprep.subr.mxu0 0.0
    %1397 = vmatpush2.msra.mxu0 0.0
    %1398 = vmatprep.subr.mxu0 0.0
    %1399 = vmatpush2.msra.mxu0 0.0
    %1400 = vmatprep.subr.mxu0 0.0
    %1401 = vmatpush2.msra.mxu0 0.0
    %1402 = vmatprep.subr.mxu0 0.0
    %1403 = vmatpush2.msra.mxu0 0.0
    %1404 = vmatprep.subr.mxu0 0.0
    %1405 = vmatpush2.msra.mxu0 0.0
    %1406 = vmatprep.subr.mxu0 0.0
    %1407 = vmatpush2.msra.mxu0 0.0
    %1408 = vmatprep.subr.mxu0 0.0
    %1409 = vmatpush2.msra.mxu0 0.0
    %1410 = vmatprep.subr.mxu0 0.0
    %1411 = vmatpush2.msra.mxu0 0.0
    %1412 = vmatprep.subr.mxu0 0.0
    %1413 = vmatpush2.msra.mxu0 0.0
    %1414 = vmatprep.subr.mxu0 0.0
    %1415 = vmatpush2.msra.mxu0 0.0
    %1416 = vmatprep.subr.mxu0 0.0
    %1417 = vmatpush2.msra.mxu0 0.0
    %1418 = vmatprep.subr.mxu0 0.0
    %1419 = vmatpush2.msra.mxu0 0.0
    %1420 = vmatprep.subr.mxu0 0.0
    %1421 = vmatpush2.msra.mxu0 0.0
    %1422 = vmatprep.subr.mxu0 0.0
    %1423 = vmatpush2.msra.mxu0 0.0
    %1424 = vmatprep.subr.mxu0 0.0
    %1425 = vmatpush2.msra.mxu0 0.0
    %1426 = vmatprep.mubr.f32.mxu0 0.0
    %1427 = vmatmul.mubr.f32.gmra.mxu0 %v1357
    %v1428 = vpop.f32.mrf.mxu0
    %v1429 = vadd.f32 %v1355, %v1428
    %v1430 = vpop.f32.mrf.mxu0
    %1431 = vmatprep.mubr.f32.mxu0 0.0
    %1432 = vmatmul.mubr.f32.gmra.mxu0 %v1360
    %v1433 = vpop.f32.mrf.mxu0
    %v1434 = vadd.f32 %v1355, %v1433
    %v1435 = vpop.f32.mrf.mxu0
    %1436 = vdwg.mxu0
    %vm1437 = vcmask 105472
    %v1438 = vsel %vm1437, %v1429, -inf
    %1439 = vmax.xlane.f32.xlu0 %v1438
    %v1440 = vpop.xlane.xlu0 %1439
    %v1441 = vsel %vm1437, %v1434, -inf
    %1442 = vmax.xlane.f32.xlu0 %v1441
    %v1443 = vpop.xlane.xlu0 %1442
    %v1444 = vsub.f32 %v1429, %v1440
    %v1445 = vsub.f32 %v1434, %v1443
    %v1446 = vmul.f32 %v1444, 1.442695
    %v1447 = vpow.pop %v1446
    %v1448 = vmul.f32 %v1445, 1.442695
    %v1449 = vpow.pop %v1448
    %v1450 = vsel %vm1437, %v1447, 0.0
    %1451 = vadd.xlane.f32.xlu0 %v1450
    %v1452 = vpop.xlane.xlu0 %1451
    %v1453 = vsel %vm1437, %v1449, 0.0
    %1454 = vadd.xlane.f32.xlu0 %v1453
    %v1455 = vpop.xlane.xlu0 %1454
    %v1456 = vrcp.pop %v1452
    %v1457 = vrcp.pop %v1455
    %v1458 = vmul.f32 %v1447, %v1456
    %v1459 = vmul.f32 %v1449, %v1457
    %v1460 = vld [vmem:[#allocation3 + $0x50] sm:$0xff]
    %v1461 = vld [vmem:[#allocation3 + $0x58] sm:$0x1f]
    %v1462 = vld [vmem:[#allocation3 + $0x5d] sm:$0x1]
    %v1463 = vlaneseq
    %v1464 = vshrl.u32 %v1463, 7
    %v1465 = vsub.s32 0, %v1464
    %v1466 = vrot.slane %v1462, %v1465
    %v1468 = vsel %vm1437, %v1458, 0
    %v1471 = vsel %vm1437, %v1459, 0
    %vm1473 = vcmask 1044480
    %v1475 = vsel %vm1473, %v1461, 0
    %1477 = vmatprep.subr.mxu0 0.0
    %1478 = vmatpush1.msra.mxu0 0.0
    %1479 = vmatprep.subr.mxu0 0.0
    %1480 = vmatpush1.msra.mxu0 0.0
    %1481 = vmatprep.subr.mxu0 0.0
    %1482 = vmatpush1.msra.mxu0 0.0
    %1483 = vmatprep.subr.mxu0 0.0
    %1484 = vmatpush1.msra.mxu0 0.0
    %1485 = vmatprep.subr.mxu0 0.0
    %1486 = vmatpush1.msra.mxu0 0.0
    %1487 = vmatprep.subr.mxu0 0.0
    %1488 = vmatpush1.msra.mxu0 0.0
    %1489 = vmatprep.subr.mxu0 0.0
    %1490 = vmatpush1.msra.mxu0 0.0
    %1491 = vmatprep.subr.mxu0 0.0
    %1492 = vmatpush1.msra.mxu0 0.0
    %1493 = vmatprep.subr.mxu0 0.0
    %1494 = vmatpush1.msra.mxu0 0.0
    %1495 = vmatprep.subr.mxu0 0.0
    %1496 = vmatpush1.msra.mxu0 0.0
    %1497 = vmatprep.subr.mxu0 0.0
    %1498 = vmatpush1.msra.mxu0 0.0
    %1499 = vmatprep.subr.mxu0 0.0
    %1500 = vmatpush1.msra.mxu0 0.0
    %1501 = vmatprep.subr.mxu0 0.0
    %1502 = vmatpush1.msra.mxu0 0.0
    %1503 = vmatprep.subr.mxu0 0.0
    %1504 = vmatpush1.msra.mxu0 0.0
    %1505 = vmatprep.subr.mxu0 0.0
    %1506 = vmatpush1.msra.mxu0 %v1475
    %1507 = vmatprep.subr.mxu0 0.0
    %1508 = vmatpush1.msra.mxu0 %v1460
    %1509 = vmatprep.subr.mxu0 0.0
    %1510 = vmatpush2.msra.mxu0 0.0
    %1511 = vmatprep.subr.mxu0 0.0
    %1512 = vmatpush2.msra.mxu0 0.0
    %1513 = vmatprep.subr.mxu0 0.0
    %1514 = vmatpush2.msra.mxu0 0.0
    %1515 = vmatprep.subr.mxu0 0.0
    %1516 = vmatpush2.msra.mxu0 0.0
    %1517 = vmatprep.subr.mxu0 0.0
    %1518 = vmatpush2.msra.mxu0 0.0
    %1519 = vmatprep.subr.mxu0 0.0
    %1520 = vmatpush2.msra.mxu0 0.0
    %1521 = vmatprep.subr.mxu0 0.0
    %1522 = vmatpush2.msra.mxu0 0.0
    %1523 = vmatprep.subr.mxu0 0.0
    %1524 = vmatpush2.msra.mxu0 0.0
    %1525 = vmatprep.subr.mxu0 0.0
    %1526 = vmatpush2.msra.mxu0 0.0
    %1527 = vmatprep.subr.mxu0 0.0
    %1528 = vmatpush2.msra.mxu0 0.0
    %1529 = vmatprep.subr.mxu0 0.0
    %1530 = vmatpush2.msra.mxu0 0.0
    %1531 = vmatprep.subr.mxu0 0.0
    %1532 = vmatpush2.msra.mxu0 0.0
    %1533 = vmatprep.subr.mxu0 0.0
    %1534 = vmatpush2.msra.mxu0 0.0
    %1535 = vmatprep.subr.mxu0 0.0
    %1536 = vmatpush2.msra.mxu0 0.0
    %1537 = vmatprep.subr.mxu0 0.0
    %1538 = vmatpush2.msra.mxu0 0.0
    %1539 = vmatprep.subr.mxu0 0.0
    %1540 = vmatpush2.msra.mxu0 0.0
    %1541 = vmatprep.mubr.f32.mxu0 0.0
    %1542 = vmatmul.mubr.f32.gmra.mxu0 %v1468
    %v1543 = vpop.f32.mrf.mxu0
    %v1544 = vadd.f32 %v1466, %v1543
    %v1545 = vpop.f32.mrf.mxu0
    %1546 = vmatprep.mubr.f32.mxu0 0.0
    %1547 = vmatmul.mubr.f32.gmra.mxu0 %v1471
    %v1548 = vpop.f32.mrf.mxu0
    %v1549 = vadd.f32 %v1466, %v1548
    %v1550 = vpop.f32.mrf.mxu0
    %1551 = vdwg.mxu0
    %v1552 = vmax.f32 %v1544, 0.0
    %v1553 = vmax.f32 %v1549, 0.0
    %1556 = vrot.lane.b32.xlu0 %v1552, 16
    %v1557 = vpop.permute.xlu0 %1556
    %1558 = vrot.lane.b32.xlu0 %v1553, 16
    %v1559 = vpop.permute.xlu0 %1558
    %vm1562 = vcmask 130048
    %v1563 = vsel %vm1562, %v1429, %v1557
    %v1564 = vsel %vm1562, %v1434, %v1559
    %vm1565 = vcmask 195584
    %1566 = vst.msk [vmem:[%s5] sm:$0xff] %vm1565, %v1563
    %1567 = vst.msk [vmem:[%s5 + $0x8] sm:$0xff] %vm1565, %v1564
    // Predicated region
    $region30: #{rql_compensating2_forward.1} parent=1 // pred_check
      _
    $region31: #{rql_compensating2_forward.1} parent=1 // pred_check_branch
      %1569 = sbr.rel (0) target = $region33
    $region32: #{rql_compensating2_forward.1} parent=1 // pred_region
      _
    $region33: #{rql_compensating2_forward.1} parent=1 // pred_fallthru
      _
    // Predicated region
    $region34: #{rql_compensating2_forward.1} parent=1 // pred_check
      _
    $region35: #{rql_compensating2_forward.1} parent=1 // pred_check_branch
      %1571 = sbr.rel (0) target = $region37
    $region36: #{rql_compensating2_forward.1} parent=1 // pred_region
      _
    $region37: #{rql_compensating2_forward.1} parent=1 // pred_fallthru
      _
    %1572 = vsyncpa [#allocation4], 1
    %1573 = vsyncpa [#allocation6], 1

</llo_original>
